<compile_context>
chip_gen: v6e
topology: v6e:2x2x1
jax: 0.10.0
libtpu: 0.0.40
codegen_flags: <defaults>
</compile_context>

<pallas_src>
import functools

import jax
import jax.numpy as jnp
from jax.experimental import pallas as pl
from jax.experimental.pallas import tpu as pltpu


def _attention_kernel(x_ref, wq_ref, wk_ref, wv_ref, wp_ref, bp_ref, o_ref, *,
                      num_heads, head_dim, scale, block_b, seq_len, dim,
                      compute_dtype):
    rows = block_b * seq_len
    inner = num_heads * head_dim

    # (block_b, N, dim) -> (block_b*N, dim); N is a multiple of 8 here so this
    # merge is layout-friendly.
    x = x_ref[...].reshape(rows, dim).astype(compute_dtype)

    # q/k/v projections (no bias): bf16 operands, f32 accumulation on the MXU.
    q = jnp.dot(x, wq_ref[...], preferred_element_type=jnp.float32)
    k = jnp.dot(x, wk_ref[...], preferred_element_type=jnp.float32)
    v = jnp.dot(x, wv_ref[...], preferred_element_type=jnp.float32)
    q = q * scale                      # fold softmax scale into Q once (cheap VPU op)

    q3 = q.reshape(block_b, seq_len, inner)
    k3 = k.reshape(block_b, seq_len, inner)
    v3 = v.reshape(block_b, seq_len, inner)

    wp = wp_ref[...]                   # (inner, dim), compute dtype

    # Per-head attention; each head's context is folded straight into the
    # output projection so no concatenate / long-lived per-head list exists.
    acc = jnp.zeros((rows, dim), jnp.float32)
    for h in range(num_heads):         # static unroll (num_heads is small)
        sl = slice(h * head_dim, (h + 1) * head_dim)
        qh = q3[:, :, sl].astype(compute_dtype)   # (block_b, N, hd)
        kh = k3[:, :, sl].astype(compute_dtype)
        vh = v3[:, :, sl].astype(compute_dtype)

        s = jnp.einsum("bqd,bkd->bqk", qh, kh,
                       preferred_element_type=jnp.float32)  # (block_b, N, N)
        s = s - jnp.max(s, axis=-1, keepdims=True)
        p = jnp.exp(s)
        p = p * pl.reciprocal(jnp.sum(p, axis=-1, keepdims=True), approx=True)

        ctx = jnp.einsum("bqk,bkd->bqd", p.astype(compute_dtype), vh,
                         preferred_element_type=jnp.float32)  # (block_b, N, hd)
        ctx = ctx.reshape(rows, head_dim).astype(compute_dtype)
        acc = acc + jnp.dot(ctx, wp[sl, :], preferred_element_type=jnp.float32)

    # TODO(synk): attn_drop / proj_drop are identity (p=0.0); stochastic dropout
    # would need pltpu.prng_seed / prng_random_bits and is not implemented.
    out = acc + bp_ref[...]            # projection bias, f32
    o_ref[...] = out.reshape(block_b, seq_len, dim).astype(o_ref.dtype)


def _pick_block_b(batch, seq_len, target_rows=256):
    """Largest divisor of `batch` such that block_b*seq_len <= target_rows,
    but keep >= 2 grid steps (v7x megacore / pipelining) when that does not
    drop the per-step row count below half the useful target."""
    cap = max(1, target_rows // max(seq_len, 1))
    divs = [d for d in range(1, batch + 1) if batch % d == 0]
    fits = [d for d in divs if d <= cap] or [1]
    block_b = max(fits)
    if batch // block_b < 2:
        smaller = [d for d in fits
                   if batch // d >= 2
                   and d * seq_len * 2 >= min(target_rows, batch * seq_len)]
        if smaller:
            block_b = max(smaller)
    return block_b


def attention_forward(x, w_qkv, w_proj, b_proj, *, num_heads, head_dim=None,
                      qk_scale=None, compute_dtype=jnp.bfloat16,
                      target_rows=256, block_b=None):
    batch, seq_len, dim = x.shape
    if head_dim is None:
        head_dim = dim // num_heads
    inner = num_heads * head_dim
    assert w_qkv.shape == (dim, 3 * inner)
    assert w_proj.shape == (inner, dim)
    scale = qk_scale if qk_scale is not None else head_dim ** (-0.5)

    if block_b is None:
        block_b = _pick_block_b(batch, seq_len, target_rows)
    assert batch % block_b == 0, (batch, block_b)
    grid = (batch // block_b,)

    # Split the fused qkv weight (feature order is [q|k|v] x [heads x head_dim],
    # matching the PyTorch reshape) and cast MXU operands once, wrapper-side.
    wq = w_qkv[:, :inner].astype(compute_dtype)
    wk = w_qkv[:, inner:2 * inner].astype(compute_dtype)
    wv = w_qkv[:, 2 * inner:].astype(compute_dtype)
    wp = w_proj.astype(compute_dtype)
    bp = b_proj.reshape(1, dim).astype(jnp.float32)

    kern = functools.partial(
        _attention_kernel, num_heads=num_heads, head_dim=head_dim, scale=scale,
        block_b=block_b, seq_len=seq_len, dim=dim, compute_dtype=compute_dtype)

    def fixed(shape):
        return pl.BlockSpec(shape, lambda i, _s=shape: (0,) * len(_s))

    batched = pl.BlockSpec((block_b, seq_len, dim), lambda i: (i, 0, 0))

    grid_spec = pltpu.PrefetchScalarGridSpec(
        num_scalar_prefetch=0,
        grid=grid,
        in_specs=[
            batched,                     # x
            fixed((dim, inner)),         # w_q
            fixed((dim, inner)),         # w_k
            fixed((dim, inner)),         # w_v
            fixed((inner, dim)),         # w_proj
            fixed((1, dim)),             # b_proj
        ],
        out_specs=pl.BlockSpec((block_b, seq_len, dim), lambda i: (i, 0, 0)),
    )

    # VMEM budget: (double-buffered) weights + double-buffered x/out blocks.
    w_itemsize = jnp.dtype(compute_dtype).itemsize
    w_bytes = 4 * dim * inner * w_itemsize + dim * 4
    blk_bytes = 2 * block_b * seq_len * dim * x.dtype.itemsize   # x + out block
    vmem_limit = int(min(64 * 2 ** 20,
                         max(16 * 2 ** 20, 4 * (w_bytes + 2 * blk_bytes))))

    flops = (2 * batch * seq_len * dim * 3 * inner                       # qkv
             + 4 * batch * num_heads * seq_len * seq_len * head_dim      # qk^T, attn@v
             + 2 * batch * seq_len * inner * dim)                        # proj
    cost = pl.CostEstimate(
        flops=flops,
        transcendentals=batch * num_heads * seq_len * (seq_len + 1),
        bytes_accessed=2 * batch * seq_len * dim * x.dtype.itemsize + w_bytes)

    return pl.pallas_call(
        kern,
        out_shape=jax.ShapeDtypeStruct((batch, seq_len, dim), x.dtype),
        grid_spec=grid_spec,
        compiler_params=pltpu.CompilerParams(
            dimension_semantics=("parallel",),
            vmem_limit_bytes=vmem_limit),
        cost_estimate=cost,
    )(x, wq, wk, wv, wp, bp)


def attention_ref(x, w_qkv, w_proj, b_proj, *, num_heads, head_dim=None,
                  qk_scale=None):
    """Pure-JAX f32 reference replicating the PyTorch forward pass."""
    B, N, C = x.shape
    if head_dim is None:
        head_dim = C // num_heads
    inner = num_heads * head_dim
    scale = qk_scale if qk_scale is not None else head_dim ** (-0.5)

    qkv = x @ w_qkv                                           # (B, N, 3*inner)
    qkv = qkv.reshape(B, N, 3, num_heads, head_dim).transpose(2, 0, 3, 1, 4)
    q, k, v = qkv[0], qkv[1], qkv[2]                          # (B, H, N, hd)
    q = q * scale
    attn = jax.nn.softmax(jnp.einsum("bhnd,bhmd->bhnm", q, k), axis=-1)
    y = jnp.einsum("bhnm,bhmd->bhnd", attn, v)
    y = y.transpose(0, 2, 1, 3).reshape(B, N, inner)
    return y @ w_proj + b_proj


if __name__ == "__main__":
    # Small shapes consistent with the module's forward: x is (B, N, C).
    B, N, dim = 2, 8, 32
    num_heads = 4
    head_dim = dim // num_heads          # 8
    inner = num_heads * head_dim

    key = jax.random.PRNGKey(0)
    kx, kqkv, kp, kb = jax.random.split(key, 4)

    x = jax.random.normal(kx, (B, N, dim), jnp.float32)
    w_qkv = 0.05 * jax.random.normal(kqkv, (dim, 3 * inner), jnp.float32)
    w_proj = 0.05 * jax.random.normal(kp, (inner, dim), jnp.float32)
    b_proj = 0.01 * jax.random.normal(kb, (dim,), jnp.float32)

    out = attention_forward(x, w_qkv, w_proj, b_proj, num_heads=num_heads)
    out = jax.block_until_ready(out)

    ref = attention_ref(x, w_qkv, w_proj, b_proj, num_heads=num_heads)
    assert out.shape == ref.shape and out.dtype == x.dtype
    # bf16 MXU operands + approx softmax reciprocal -> relaxed tolerance.
    assert jnp.allclose(out, ref, atol=1e-2, rtol=1e-2), (
        float(jnp.max(jnp.abs(out - ref))))

    print("KERNEL_OK")
</pallas_src>

<mosaic_0001>
module attributes {stable_mosaic.version = 11 : i64} {
  func.func @_attention_kernel(%arg0: i32, %arg1: memref<1x8x32xf32, #tpu.memory_space<vmem>>, %arg2: memref<32x32xbf16, #tpu.memory_space<vmem>>, %arg3: memref<32x32xbf16, #tpu.memory_space<vmem>>, %arg4: memref<32x32xbf16, #tpu.memory_space<vmem>>, %arg5: memref<32x32xbf16, #tpu.memory_space<vmem>>, %arg6: memref<1x32xf32, #tpu.memory_space<vmem>>, %arg7: memref<1x8x32xf32, #tpu.memory_space<vmem>>) attributes {dimension_semantics = [#tpu.dimension_semantics<parallel>], iteration_bounds = array<i64: 2>, scalar_prefetch = 0 : i64, scratch_operands = 0 : i64, tpu.core_type = #tpu.core_type<tc>, window_params = [{transform_indices = @transform_0, window_bounds = array<i64: 1, 8, 32>}, {pipeline_mode = #tpu.pipeline_mode<synchronous>, transform_indices = @transform_1, window_bounds = array<i64: 32, 32>}, {pipeline_mode = #tpu.pipeline_mode<synchronous>, transform_indices = @transform_2, window_bounds = array<i64: 32, 32>}, {pipeline_mode = #tpu.pipeline_mode<synchronous>, transform_indices = @transform_3, window_bounds = array<i64: 32, 32>}, {pipeline_mode = #tpu.pipeline_mode<synchronous>, transform_indices = @transform_4, window_bounds = array<i64: 32, 32>}, {pipeline_mode = #tpu.pipeline_mode<synchronous>, transform_indices = @transform_5, window_bounds = array<i64: 1, 32>}, {transform_indices = @transform_6, window_bounds = array<i64: 1, 8, 32>}]} {
    %c0 = arith.constant 0 : index
    %c0_0 = arith.constant 0 : index
    %c0_1 = arith.constant 0 : index
    %0 = vector.load %arg1[%c0, %c0_0, %c0_1] : memref<1x8x32xf32, #tpu.memory_space<vmem>>, vector<1x8x32xf32>
    %1 = vector.shape_cast %0 : vector<1x8x32xf32> to vector<8x32xf32>
    %2 = arith.truncf %1 : vector<8x32xf32> to vector<8x32xbf16>
    %c0_2 = arith.constant 0 : index
    %c0_3 = arith.constant 0 : index
    %3 = vector.load %arg2[%c0_2, %c0_3] : memref<32x32xbf16, #tpu.memory_space<vmem>>, vector<32x32xbf16>
    %cst = arith.constant dense<0.000000e+00> : vector<8x32xf32>
    %4 = tpu.matmul %2, %3, %cst {dimension_numbers = #tpu.dot_dimension_numbers<[1], [0], [0], [1], [0, 0, 1, 1], [], []>} : vector<8x32xbf16>, vector<32x32xbf16>, vector<8x32xf32> -> vector<8x32xf32>
    %c0_4 = arith.constant 0 : index
    %c0_5 = arith.constant 0 : index
    %5 = vector.load %arg3[%c0_4, %c0_5] : memref<32x32xbf16, #tpu.memory_space<vmem>>, vector<32x32xbf16>
    %cst_6 = arith.constant dense<0.000000e+00> : vector<8x32xf32>
    %6 = tpu.matmul %2, %5, %cst_6 {dimension_numbers = #tpu.dot_dimension_numbers<[1], [0], [0], [1], [0, 0, 1, 1], [], []>} : vector<8x32xbf16>, vector<32x32xbf16>, vector<8x32xf32> -> vector<8x32xf32>
    %c0_7 = arith.constant 0 : index
    %c0_8 = arith.constant 0 : index
    %7 = vector.load %arg4[%c0_7, %c0_8] : memref<32x32xbf16, #tpu.memory_space<vmem>>, vector<32x32xbf16>
    %cst_9 = arith.constant dense<0.000000e+00> : vector<8x32xf32>
    %8 = tpu.matmul %2, %7, %cst_9 {dimension_numbers = #tpu.dot_dimension_numbers<[1], [0], [0], [1], [0, 0, 1, 1], [], []>} : vector<8x32xbf16>, vector<32x32xbf16>, vector<8x32xf32> -> vector<8x32xf32>
    %cst_10 = arith.constant 0.353553385 : f32
    %9 = vector.broadcast %cst_10 : f32 to vector<8x32xf32>
    %10 = arith.mulf %4, %9 : vector<8x32xf32>
    %11 = vector.shape_cast %10 : vector<8x32xf32> to vector<1x8x32xf32>
    %12 = vector.shape_cast %6 : vector<8x32xf32> to vector<1x8x32xf32>
    %13 = vector.shape_cast %8 : vector<8x32xf32> to vector<1x8x32xf32>
    %c0_11 = arith.constant 0 : index
    %c0_12 = arith.constant 0 : index
    %14 = vector.load %arg5[%c0_11, %c0_12] : memref<32x32xbf16, #tpu.memory_space<vmem>>, vector<32x32xbf16>
    %cst_13 = arith.constant 0.000000e+00 : f32
    %15 = vector.broadcast %cst_13 : f32 to vector<8x32xf32>
    %16 = vector.extract_strided_slice %11 {offsets = [0, 0, 0], sizes = [1, 8, 8], strides = [1, 1, 1]} : vector<1x8x32xf32> to vector<1x8x8xf32>
    %17 = arith.truncf %16 : vector<1x8x8xf32> to vector<1x8x8xbf16>
    %18 = vector.extract_strided_slice %12 {offsets = [0, 0, 0], sizes = [1, 8, 8], strides = [1, 1, 1]} : vector<1x8x32xf32> to vector<1x8x8xf32>
    %19 = arith.truncf %18 : vector<1x8x8xf32> to vector<1x8x8xbf16>
    %20 = vector.extract_strided_slice %13 {offsets = [0, 0, 0], sizes = [1, 8, 8], strides = [1, 1, 1]} : vector<1x8x32xf32> to vector<1x8x8xf32>
    %21 = arith.truncf %20 : vector<1x8x8xf32> to vector<1x8x8xbf16>
    "tpu.trace_start"() <{level = 10 : i32, message = "bqd,bkd->bqk"}> : () -> ()
    %cst_14 = arith.constant dense<0.000000e+00> : vector<1x8x8xf32>
    %22 = tpu.matmul %17, %19, %cst_14 {dimension_numbers = #tpu.dot_dimension_numbers<[2], [2], [1], [1], [0, 0, 0, 1, 1, 1], [0], [0]>} : vector<1x8x8xbf16>, vector<1x8x8xbf16>, vector<1x8x8xf32> -> vector<1x8x8xf32>
    "tpu.trace_stop"() : () -> ()
    %cst_15 = arith.constant dense<0xFF800000> : vector<1x8xf32>
    %23 = vector.multi_reduction <maximumf>, %22, %cst_15 [2] : vector<1x8x8xf32> to vector<1x8xf32>
    %24 = vector.shape_cast %23 : vector<1x8xf32> to vector<1x8x1xf32>
    %25 = vector.broadcast %24 : vector<1x8x1xf32> to vector<1x8x8xf32>
    %26 = arith.subf %22, %25 : vector<1x8x8xf32>
    %27 = math.exp %26 : vector<1x8x8xf32>
    %cst_16 = arith.constant dense<0.000000e+00> : vector<1x8xf32>
    %28 = vector.multi_reduction <add>, %27, %cst_16 [2] : vector<1x8x8xf32> to vector<1x8xf32>
    %29 = vector.shape_cast %28 : vector<1x8xf32> to vector<1x8x1xf32>
    %30 = tpu.reciprocal %29 {approx = true} : vector<1x8x1xf32> -> vector<1x8x1xf32>
    %31 = vector.broadcast %30 : vector<1x8x1xf32> to vector<1x8x8xf32>
    %32 = arith.mulf %27, %31 : vector<1x8x8xf32>
    %33 = arith.truncf %32 : vector<1x8x8xf32> to vector<1x8x8xbf16>
    "tpu.trace_start"() <{level = 10 : i32, message = "bqk,bkd->bqd"}> : () -> ()
    %cst_17 = arith.constant dense<0.000000e+00> : vector<1x8x8xf32>
    %34 = tpu.matmul %33, %21, %cst_17 {dimension_numbers = #tpu.dot_dimension_numbers<[2], [1], [1], [2], [0, 0, 0, 1, 1, 2], [0], [0]>} : vector<1x8x8xbf16>, vector<1x8x8xbf16>, vector<1x8x8xf32> -> vector<1x8x8xf32>
    "tpu.trace_stop"() : () -> ()
    %35 = vector.shape_cast %34 : vector<1x8x8xf32> to vector<8x8xf32>
    %36 = arith.truncf %35 : vector<8x8xf32> to vector<8x8xbf16>
    %37 = vector.extract_strided_slice %14 {offsets = [0, 0], sizes = [8, 32], strides = [1, 1]} : vector<32x32xbf16> to vector<8x32xbf16>
    %cst_18 = arith.constant dense<0.000000e+00> : vector<8x32xf32>
    %38 = tpu.matmul %36, %37, %cst_18 {dimension_numbers = #tpu.dot_dimension_numbers<[1], [0], [0], [1], [0, 0, 1, 1], [], []>} : vector<8x8xbf16>, vector<8x32xbf16>, vector<8x32xf32> -> vector<8x32xf32>
    %39 = arith.addf %15, %38 : vector<8x32xf32>
    %40 = vector.extract_strided_slice %11 {offsets = [0, 0, 8], sizes = [1, 8, 8], strides = [1, 1, 1]} : vector<1x8x32xf32> to vector<1x8x8xf32>
    %41 = arith.truncf %40 : vector<1x8x8xf32> to vector<1x8x8xbf16>
    %42 = vector.extract_strided_slice %12 {offsets = [0, 0, 8], sizes = [1, 8, 8], strides = [1, 1, 1]} : vector<1x8x32xf32> to vector<1x8x8xf32>
    %43 = arith.truncf %42 : vector<1x8x8xf32> to vector<1x8x8xbf16>
    %44 = vector.extract_strided_slice %13 {offsets = [0, 0, 8], sizes = [1, 8, 8], strides = [1, 1, 1]} : vector<1x8x32xf32> to vector<1x8x8xf32>
    %45 = arith.truncf %44 : vector<1x8x8xf32> to vector<1x8x8xbf16>
    "tpu.trace_start"() <{level = 10 : i32, message = "bqd,bkd->bqk"}> : () -> ()
    %cst_19 = arith.constant dense<0.000000e+00> : vector<1x8x8xf32>
    %46 = tpu.matmul %41, %43, %cst_19 {dimension_numbers = #tpu.dot_dimension_numbers<[2], [2], [1], [1], [0, 0, 0, 1, 1, 1], [0], [0]>} : vector<1x8x8xbf16>, vector<1x8x8xbf16>, vector<1x8x8xf32> -> vector<1x8x8xf32>
    "tpu.trace_stop"() : () -> ()
    %cst_20 = arith.constant dense<0xFF800000> : vector<1x8xf32>
    %47 = vector.multi_reduction <maximumf>, %46, %cst_20 [2] : vector<1x8x8xf32> to vector<1x8xf32>
    %48 = vector.shape_cast %47 : vector<1x8xf32> to vector<1x8x1xf32>
    %49 = vector.broadcast %48 : vector<1x8x1xf32> to vector<1x8x8xf32>
    %50 = arith.subf %46, %49 : vector<1x8x8xf32>
    %51 = math.exp %50 : vector<1x8x8xf32>
    %cst_21 = arith.constant dense<0.000000e+00> : vector<1x8xf32>
    %52 = vector.multi_reduction <add>, %51, %cst_21 [2] : vector<1x8x8xf32> to vector<1x8xf32>
    %53 = vector.shape_cast %52 : vector<1x8xf32> to vector<1x8x1xf32>
    %54 = tpu.reciprocal %53 {approx = true} : vector<1x8x1xf32> -> vector<1x8x1xf32>
    %55 = vector.broadcast %54 : vector<1x8x1xf32> to vector<1x8x8xf32>
    %56 = arith.mulf %51, %55 : vector<1x8x8xf32>
    %57 = arith.truncf %56 : vector<1x8x8xf32> to vector<1x8x8xbf16>
    "tpu.trace_start"() <{level = 10 : i32, message = "bqk,bkd->bqd"}> : () -> ()
    %cst_22 = arith.constant dense<0.000000e+00> : vector<1x8x8xf32>
    %58 = tpu.matmul %57, %45, %cst_22 {dimension_numbers = #tpu.dot_dimension_numbers<[2], [1], [1], [2], [0, 0, 0, 1, 1, 2], [0], [0]>} : vector<1x8x8xbf16>, vector<1x8x8xbf16>, vector<1x8x8xf32> -> vector<1x8x8xf32>
    "tpu.trace_stop"() : () -> ()
    %59 = vector.shape_cast %58 : vector<1x8x8xf32> to vector<8x8xf32>
    %60 = arith.truncf %59 : vector<8x8xf32> to vector<8x8xbf16>
    %61 = vector.extract_strided_slice %14 {offsets = [8, 0], sizes = [8, 32], strides = [1, 1]} : vector<32x32xbf16> to vector<8x32xbf16>
    %cst_23 = arith.constant dense<0.000000e+00> : vector<8x32xf32>
    %62 = tpu.matmul %60, %61, %cst_23 {dimension_numbers = #tpu.dot_dimension_numbers<[1], [0], [0], [1], [0, 0, 1, 1], [], []>} : vector<8x8xbf16>, vector<8x32xbf16>, vector<8x32xf32> -> vector<8x32xf32>
    %63 = arith.addf %39, %62 : vector<8x32xf32>
    %64 = vector.extract_strided_slice %11 {offsets = [0, 0, 16], sizes = [1, 8, 8], strides = [1, 1, 1]} : vector<1x8x32xf32> to vector<1x8x8xf32>
    %65 = arith.truncf %64 : vector<1x8x8xf32> to vector<1x8x8xbf16>
    %66 = vector.extract_strided_slice %12 {offsets = [0, 0, 16], sizes = [1, 8, 8], strides = [1, 1, 1]} : vector<1x8x32xf32> to vector<1x8x8xf32>
    %67 = arith.truncf %66 : vector<1x8x8xf32> to vector<1x8x8xbf16>
    %68 = vector.extract_strided_slice %13 {offsets = [0, 0, 16], sizes = [1, 8, 8], strides = [1, 1, 1]} : vector<1x8x32xf32> to vector<1x8x8xf32>
    %69 = arith.truncf %68 : vector<1x8x8xf32> to vector<1x8x8xbf16>
    "tpu.trace_start"() <{level = 10 : i32, message = "bqd,bkd->bqk"}> : () -> ()
    %cst_24 = arith.constant dense<0.000000e+00> : vector<1x8x8xf32>
    %70 = tpu.matmul %65, %67, %cst_24 {dimension_numbers = #tpu.dot_dimension_numbers<[2], [2], [1], [1], [0, 0, 0, 1, 1, 1], [0], [0]>} : vector<1x8x8xbf16>, vector<1x8x8xbf16>, vector<1x8x8xf32> -> vector<1x8x8xf32>
    "tpu.trace_stop"() : () -> ()
    %cst_25 = arith.constant dense<0xFF800000> : vector<1x8xf32>
    %71 = vector.multi_reduction <maximumf>, %70, %cst_25 [2] : vector<1x8x8xf32> to vector<1x8xf32>
    %72 = vector.shape_cast %71 : vector<1x8xf32> to vector<1x8x1xf32>
    %73 = vector.broadcast %72 : vector<1x8x1xf32> to vector<1x8x8xf32>
    %74 = arith.subf %70, %73 : vector<1x8x8xf32>
    %75 = math.exp %74 : vector<1x8x8xf32>
    %cst_26 = arith.constant dense<0.000000e+00> : vector<1x8xf32>
    %76 = vector.multi_reduction <add>, %75, %cst_26 [2] : vector<1x8x8xf32> to vector<1x8xf32>
    %77 = vector.shape_cast %76 : vector<1x8xf32> to vector<1x8x1xf32>
    %78 = tpu.reciprocal %77 {approx = true} : vector<1x8x1xf32> -> vector<1x8x1xf32>
    %79 = vector.broadcast %78 : vector<1x8x1xf32> to vector<1x8x8xf32>
    %80 = arith.mulf %75, %79 : vector<1x8x8xf32>
    %81 = arith.truncf %80 : vector<1x8x8xf32> to vector<1x8x8xbf16>
    "tpu.trace_start"() <{level = 10 : i32, message = "bqk,bkd->bqd"}> : () -> ()
    %cst_27 = arith.constant dense<0.000000e+00> : vector<1x8x8xf32>
    %82 = tpu.matmul %81, %69, %cst_27 {dimension_numbers = #tpu.dot_dimension_numbers<[2], [1], [1], [2], [0, 0, 0, 1, 1, 2], [0], [0]>} : vector<1x8x8xbf16>, vector<1x8x8xbf16>, vector<1x8x8xf32> -> vector<1x8x8xf32>
    "tpu.trace_stop"() : () -> ()
    %83 = vector.shape_cast %82 : vector<1x8x8xf32> to vector<8x8xf32>
    %84 = arith.truncf %83 : vector<8x8xf32> to vector<8x8xbf16>
    %85 = vector.extract_strided_slice %14 {offsets = [16, 0], sizes = [8, 32], strides = [1, 1]} : vector<32x32xbf16> to vector<8x32xbf16>
    %cst_28 = arith.constant dense<0.000000e+00> : vector<8x32xf32>
    %86 = tpu.matmul %84, %85, %cst_28 {dimension_numbers = #tpu.dot_dimension_numbers<[1], [0], [0], [1], [0, 0, 1, 1], [], []>} : vector<8x8xbf16>, vector<8x32xbf16>, vector<8x32xf32> -> vector<8x32xf32>
    %87 = arith.addf %63, %86 : vector<8x32xf32>
    %88 = vector.extract_strided_slice %11 {offsets = [0, 0, 24], sizes = [1, 8, 8], strides = [1, 1, 1]} : vector<1x8x32xf32> to vector<1x8x8xf32>
    %89 = arith.truncf %88 : vector<1x8x8xf32> to vector<1x8x8xbf16>
    %90 = vector.extract_strided_slice %12 {offsets = [0, 0, 24], sizes = [1, 8, 8], strides = [1, 1, 1]} : vector<1x8x32xf32> to vector<1x8x8xf32>
    %91 = arith.truncf %90 : vector<1x8x8xf32> to vector<1x8x8xbf16>
    %92 = vector.extract_strided_slice %13 {offsets = [0, 0, 24], sizes = [1, 8, 8], strides = [1, 1, 1]} : vector<1x8x32xf32> to vector<1x8x8xf32>
    %93 = arith.truncf %92 : vector<1x8x8xf32> to vector<1x8x8xbf16>
    "tpu.trace_start"() <{level = 10 : i32, message = "bqd,bkd->bqk"}> : () -> ()
    %cst_29 = arith.constant dense<0.000000e+00> : vector<1x8x8xf32>
    %94 = tpu.matmul %89, %91, %cst_29 {dimension_numbers = #tpu.dot_dimension_numbers<[2], [2], [1], [1], [0, 0, 0, 1, 1, 1], [0], [0]>} : vector<1x8x8xbf16>, vector<1x8x8xbf16>, vector<1x8x8xf32> -> vector<1x8x8xf32>
    "tpu.trace_stop"() : () -> ()
    %cst_30 = arith.constant dense<0xFF800000> : vector<1x8xf32>
    %95 = vector.multi_reduction <maximumf>, %94, %cst_30 [2] : vector<1x8x8xf32> to vector<1x8xf32>
    %96 = vector.shape_cast %95 : vector<1x8xf32> to vector<1x8x1xf32>
    %97 = vector.broadcast %96 : vector<1x8x1xf32> to vector<1x8x8xf32>
    %98 = arith.subf %94, %97 : vector<1x8x8xf32>
    %99 = math.exp %98 : vector<1x8x8xf32>
    %cst_31 = arith.constant dense<0.000000e+00> : vector<1x8xf32>
    %100 = vector.multi_reduction <add>, %99, %cst_31 [2] : vector<1x8x8xf32> to vector<1x8xf32>
    %101 = vector.shape_cast %100 : vector<1x8xf32> to vector<1x8x1xf32>
    %102 = tpu.reciprocal %101 {approx = true} : vector<1x8x1xf32> -> vector<1x8x1xf32>
    %103 = vector.broadcast %102 : vector<1x8x1xf32> to vector<1x8x8xf32>
    %104 = arith.mulf %99, %103 : vector<1x8x8xf32>
    %105 = arith.truncf %104 : vector<1x8x8xf32> to vector<1x8x8xbf16>
    "tpu.trace_start"() <{level = 10 : i32, message = "bqk,bkd->bqd"}> : () -> ()
    %cst_32 = arith.constant dense<0.000000e+00> : vector<1x8x8xf32>
    %106 = tpu.matmul %105, %93, %cst_32 {dimension_numbers = #tpu.dot_dimension_numbers<[2], [1], [1], [2], [0, 0, 0, 1, 1, 2], [0], [0]>} : vector<1x8x8xbf16>, vector<1x8x8xbf16>, vector<1x8x8xf32> -> vector<1x8x8xf32>
    "tpu.trace_stop"() : () -> ()
    %107 = vector.shape_cast %106 : vector<1x8x8xf32> to vector<8x8xf32>
    %108 = arith.truncf %107 : vector<8x8xf32> to vector<8x8xbf16>
    %109 = vector.extract_strided_slice %14 {offsets = [24, 0], sizes = [8, 32], strides = [1, 1]} : vector<32x32xbf16> to vector<8x32xbf16>
    %cst_33 = arith.constant dense<0.000000e+00> : vector<8x32xf32>
    %110 = tpu.matmul %108, %109, %cst_33 {dimension_numbers = #tpu.dot_dimension_numbers<[1], [0], [0], [1], [0, 0, 1, 1], [], []>} : vector<8x8xbf16>, vector<8x32xbf16>, vector<8x32xf32> -> vector<8x32xf32>
    %111 = arith.addf %87, %110 : vector<8x32xf32>
    %c0_34 = arith.constant 0 : index
    %c0_35 = arith.constant 0 : index
    %112 = vector.load %arg6[%c0_34, %c0_35] : memref<1x32xf32, #tpu.memory_space<vmem>>, vector<1x32xf32>
    %113 = vector.broadcast %112 : vector<1x32xf32> to vector<8x32xf32>
    %114 = arith.addf %111, %113 : vector<8x32xf32>
    %115 = vector.shape_cast %114 : vector<8x32xf32> to vector<1x8x32xf32>
    %c0_36 = arith.constant 0 : index
    %c0_37 = arith.constant 0 : index
    %c0_38 = arith.constant 0 : index
    %116 = vector.load %arg7[%c0_36, %c0_37, %c0_38] : memref<1x8x32xf32, #tpu.memory_space<vmem>>, vector<1x8x32xf32>
    tpu.vector_store %arg7[%c0_36, %c0_37, %c0_38], %115 {strides = array<i32>} : memref<1x8x32xf32, #tpu.memory_space<vmem>>, vector<1x8x32xf32>,
    return
  }
  func.func @transform_0(%arg0: i32) -> (i32, i32, i32) {
    %c0_i32 = arith.constant 0 : i32
    %c0_i32_0 = arith.constant 0 : i32
    %c0_i32_1 = arith.constant 0 : i32
    return %arg0, %c0_i32, %c0_i32_0 : i32, i32, i32
  }
  func.func @transform_1(%arg0: i32) -> (i32, i32) {
    %c0_i32 = arith.constant 0 : i32
    %c0_i32_0 = arith.constant 0 : i32
    %c0_i32_1 = arith.constant 0 : i32
    return %c0_i32, %c0_i32_0 : i32, i32
  }
  func.func @transform_2(%arg0: i32) -> (i32, i32) {
    %c0_i32 = arith.constant 0 : i32
    %c0_i32_0 = arith.constant 0 : i32
    %c0_i32_1 = arith.constant 0 : i32
    return %c0_i32, %c0_i32_0 : i32, i32
  }
  func.func @transform_3(%arg0: i32) -> (i32, i32) {
    %c0_i32 = arith.constant 0 : i32
    %c0_i32_0 = arith.constant 0 : i32
    %c0_i32_1 = arith.constant 0 : i32
    return %c0_i32, %c0_i32_0 : i32, i32
  }
  func.func @transform_4(%arg0: i32) -> (i32, i32) {
    %c0_i32 = arith.constant 0 : i32
    %c0_i32_0 = arith.constant 0 : i32
    %c0_i32_1 = arith.constant 0 : i32
    return %c0_i32, %c0_i32_0 : i32, i32
  }
  func.func @transform_5(%arg0: i32) -> (i32, i32) {
    %c0_i32 = arith.constant 0 : i32
    %c0_i32_0 = arith.constant 0 : i32
    %c0_i32_1 = arith.constant 0 : i32
    return %c0_i32, %c0_i32_0 : i32, i32
  }
  func.func @transform_6(%arg0: i32) -> (i32, i32, i32) {
    %c0_i32 = arith.constant 0 : i32
    %c0_i32_0 = arith.constant 0 : i32
    %c0_i32_1 = arith.constant 0 : i32
    return %arg0, %c0_i32, %c0_i32_0 : i32, i32, i32
  }
}

</mosaic_0001>

<llo_original>
// kernel: tpu_custom_call.1
$region0: #{tpu_custom_call.1}
  #allocation0 [shape = 'u32[]', space=smem, size = 0x4, offset = 0x4, fixed_abs, tag = 'smem constant byte address 0x4 - core index']
  #allocation1 [shape = 'u32[144,128]{1,0:T(1,128)}', space=vmem, size = 0x12000, scoped, tag = 'internal scratch']
  %s0 = inlined_call_operand.hbm [shape: f32[2,8,32], index: 0, kind: input, shape index: {}]
  %s1 = inlined_call_operand.hbm [shape: bf16[32,32], index: 1, kind: input, shape index: {}]
  %s2 = inlined_call_operand.hbm [shape: bf16[32,32], index: 2, kind: input, shape index: {}]
  %s3 = inlined_call_operand.hbm [shape: bf16[32,32], index: 3, kind: input, shape index: {}]
  %s4 = inlined_call_operand.hbm [shape: bf16[32,32], index: 4, kind: input, shape index: {}]
  %s5 = inlined_call_operand.vmem [shape: f32[1,32], index: 5, kind: input, shape index: {}]
  %s6 = inlined_call_operand.hbm [shape: f32[2,8,32], index: 6, kind: output, shape index: {}]
  %s7 = sld [smem:[#allocation0]]
  $region77: #{tpu_custom_call.1} parent=0
    _
  %s9 = ssub.s32 1, %s7
  %s10 = scalar_select 0, %s9, %s7
  $region1: #{tpu_custom_call.1} parent=0
    #allocation2 [shape = 'u8[8192]{0}', space=vmem, size = 0x2000, scoped, tag = 'input window, operand 0']
    #allocation3 [shape = 's32[2]{0}', space=sflag, size = 0x8, scoped, tag = 'scoped memory for tpu_custom_call.1']
    #allocation4 [shape = 's32[2]{0}', space=sflag, size = 0x8, scoped, tag = 'scoped memory for tpu_custom_call.1']
    #allocation5 [shape = 'u8[8192]{0}', space=vmem, size = 0x2000, scoped, tag = 'input window, operand 1, single buffered']
    #allocation6 [shape = 's32[1]{0}', space=sflag, size = 0x4, scoped, tag = 'scoped memory for tpu_custom_call.1']
    #allocation7 [shape = 'u8[8192]{0}', space=vmem, size = 0x2000, scoped, tag = 'input window, operand 2, single buffered']
    #allocation8 [shape = 'u8[8192]{0}', space=vmem, size = 0x2000, scoped, tag = 'input window, operand 3, single buffered']
    #allocation9 [shape = 's32[1]{0}', space=sflag, size = 0x4, scoped, tag = 'scoped memory for tpu_custom_call.1']
    #allocation10 [shape = 'u8[8192]{0}', space=vmem, size = 0x2000, scoped, tag = 'input window, operand 4, single buffered']
    #allocation11 [shape = 'u8[8192]{0}', space=vmem, size = 0x2000, scoped, tag = 'output window, operand 0']
    %11 = vsyncpa [#allocation3], 0
    %s12 = scalar_lea.sflag [#allocation3], 1
    %13 = vsyncpa %s12, 0
    %14 = vsyncpa [#allocation6], 0
    %15 = vsyncpa [#allocation9], 0
    %16 = vsyncpa [#allocation4], 0
    %s17 = scalar_lea.sflag [#allocation4], 1
    %18 = vsyncpa %s17, 0
    loop: start=0, step=1, limit=4
    $region2: #{tpu_custom_call.1} parent=1 // loop_pre_header
      _
    $region3: #{tpu_custom_call.1} parent=1 // loop_header
      %s20 = sphi 0, %s24
      %p21 = scmp.ge.s32.totalorder %s20, 4
      %s30 = sphi 0, %s32
      %s33 = sphi 0, %s30
      %s34 = sphi 0, %s33
      %s50 = sphi 0, %s34
      %s54 = sphi 0, %s54
      %s56 = sphi 0, %s54
      %s57 = sphi 0, %s56
      %s71 = sphi 0, %s57
      %s75 = sphi 0, %s75
      %s77 = sphi 0, %s75
      %s78 = sphi 0, %s77
      %s92 = sphi 0, %s78
      %s96 = sphi 0, %s96
      %s98 = sphi 0, %s96
      %s99 = sphi 0, %s98
      %s113 = sphi 0, %s99
      %s117 = sphi 0, %s117
      %s119 = sphi 0, %s117
      %s120 = sphi 0, %s119
      %s134 = sphi 0, %s120
      %s138 = sphi 0, %s138
      %s140 = sphi 0, %s138
      %s141 = sphi 0, %s140
      %s155 = sphi 0, %s141
      %s161 = sphi 0, %s163
      %s164 = sphi 0, %s161
      %s165 = sphi 0, %s164
      %s181 = sphi 0, %s165
    $region4: #{tpu_custom_call.1} parent=1 // loop_header_branch
      %23 = sbr.rel (%p21) target = $region8
    $region5: #{tpu_custom_call.1} parent=1 // loop_body
      %s25 = ssub.s32 %s20, 1
      %s26 = ssub.s32 %s20, 2
      %s27 = sadd.s32 %s20, 1
      %s28 = ssub.s32 %s20, %s27
      %p29 = scmp.eq.s32.totalorder %s28, 0
      %s31 = sadd.s32 %s30, 1
      %s32 = scalar_select %p29, %s30, %s31
      %p35 = pneg %p29
      %p36 = scmp.eq.s32.totalorder %s20, 1
      %p37 = por %p35, %p36
      %p38 = scmp.ne.s32.totalorder %s30, %s33
      %p39 = scmp.eq.s32.totalorder %s20, 0
      %p40 = por %p38, %p39
      %p41 = scmp.ne.s32.totalorder %s30, %s33
      %p42 = scmp.eq.s32.totalorder %s25, 1
      %p43 = por %p41, %p42
      %p44 = scmp.ne.s32.totalorder %s33, %s34
      %p45 = scmp.eq.s32.totalorder %s25, 0
      %p46 = por %p44, %p45
      %p47 = scmp.ne.s32.totalorder %s33, %s34
      %p48 = scmp.eq.s32.totalorder %s26, 1
      %p49 = por %p47, %p48
      %p51 = scmp.ne.s32.totalorder %s34, %s50
      %p52 = scmp.eq.s32.totalorder %s26, 0
      %p53 = por %p51, %p52
      %s55 = sadd.s32 %s54, 1
      %p58 = scmp.eq.s32.totalorder %s20, 1
      %p59 = scmp.ne.s32.totalorder %s54, %s56
      %p60 = scmp.eq.s32.totalorder %s20, 0
      %p61 = por %p59, %p60
      %p62 = scmp.ne.s32.totalorder %s54, %s56
      %p63 = scmp.eq.s32.totalorder %s25, 1
      %p64 = por %p62, %p63
      %p65 = scmp.ne.s32.totalorder %s56, %s57
      %p66 = scmp.eq.s32.totalorder %s25, 0
      %p67 = por %p65, %p66
      %p68 = scmp.ne.s32.totalorder %s56, %s57
      %p69 = scmp.eq.s32.totalorder %s26, 1
      %p70 = por %p68, %p69
      %p72 = scmp.ne.s32.totalorder %s57, %s71
      %p73 = scmp.eq.s32.totalorder %s26, 0
      %p74 = por %p72, %p73
      %s76 = sadd.s32 %s75, 1
      %p79 = scmp.eq.s32.totalorder %s20, 1
      %p80 = scmp.ne.s32.totalorder %s75, %s77
      %p81 = scmp.eq.s32.totalorder %s20, 0
      %p82 = por %p80, %p81
      %p83 = scmp.ne.s32.totalorder %s75, %s77
      %p84 = scmp.eq.s32.totalorder %s25, 1
      %p85 = por %p83, %p84
      %p86 = scmp.ne.s32.totalorder %s77, %s78
      %p87 = scmp.eq.s32.totalorder %s25, 0
      %p88 = por %p86, %p87
      %p89 = scmp.ne.s32.totalorder %s77, %s78
      %p90 = scmp.eq.s32.totalorder %s26, 1
      %p91 = por %p89, %p90
      %p93 = scmp.ne.s32.totalorder %s78, %s92
      %p94 = scmp.eq.s32.totalorder %s26, 0
      %p95 = por %p93, %p94
      %s97 = sadd.s32 %s96, 1
      %p100 = scmp.eq.s32.totalorder %s20, 1
      %p101 = scmp.ne.s32.totalorder %s96, %s98
      %p102 = scmp.eq.s32.totalorder %s20, 0
      %p103 = por %p101, %p102
      %p104 = scmp.ne.s32.totalorder %s96, %s98
      %p105 = scmp.eq.s32.totalorder %s25, 1
      %p106 = por %p104, %p105
      %p107 = scmp.ne.s32.totalorder %s98, %s99
      %p108 = scmp.eq.s32.totalorder %s25, 0
      %p109 = por %p107, %p108
      %p110 = scmp.ne.s32.totalorder %s98, %s99
      %p111 = scmp.eq.s32.totalorder %s26, 1
      %p112 = por %p110, %p111
      %p114 = scmp.ne.s32.totalorder %s99, %s113
      %p115 = scmp.eq.s32.totalorder %s26, 0
      %p116 = por %p114, %p115
      %s118 = sadd.s32 %s117, 1
      %p121 = scmp.eq.s32.totalorder %s20, 1
      %p122 = scmp.ne.s32.totalorder %s117, %s119
      %p123 = scmp.eq.s32.totalorder %s20, 0
      %p124 = por %p122, %p123
      %p125 = scmp.ne.s32.totalorder %s117, %s119
      %p126 = scmp.eq.s32.totalorder %s25, 1
      %p127 = por %p125, %p126
      %p128 = scmp.ne.s32.totalorder %s119, %s120
      %p129 = scmp.eq.s32.totalorder %s25, 0
      %p130 = por %p128, %p129
      %p131 = scmp.ne.s32.totalorder %s119, %s120
      %p132 = scmp.eq.s32.totalorder %s26, 1
      %p133 = por %p131, %p132
      %p135 = scmp.ne.s32.totalorder %s120, %s134
      %p136 = scmp.eq.s32.totalorder %s26, 0
      %p137 = por %p135, %p136
      %s139 = sadd.s32 %s138, 1
      %p142 = scmp.eq.s32.totalorder %s20, 1
      %p143 = scmp.ne.s32.totalorder %s138, %s140
      %p144 = scmp.eq.s32.totalorder %s20, 0
      %p145 = por %p143, %p144
      %p146 = scmp.ne.s32.totalorder %s138, %s140
      %p147 = scmp.eq.s32.totalorder %s25, 1
      %p148 = por %p146, %p147
      %p149 = scmp.ne.s32.totalorder %s140, %s141
      %p150 = scmp.eq.s32.totalorder %s25, 0
      %p151 = por %p149, %p150
      %p152 = scmp.ne.s32.totalorder %s140, %s141
      %p153 = scmp.eq.s32.totalorder %s26, 1
      %p154 = por %p152, %p153
      %p156 = scmp.ne.s32.totalorder %s141, %s155
      %p157 = scmp.eq.s32.totalorder %s26, 0
      %p158 = por %p156, %p157
      %s159 = ssub.s32 %s20, %s27
      %p160 = scmp.eq.s32.totalorder %s159, 0
      %s162 = sadd.s32 %s161, 1
      %s163 = scalar_select %p160, %s161, %s162
      %p166 = pneg %p160
      %p167 = scmp.eq.s32.totalorder %s20, 1
      %p168 = por %p166, %p167
      %p169 = scmp.ne.s32.totalorder %s161, %s164
      %p170 = scmp.eq.s32.totalorder %s20, 0
      %p171 = por %p169, %p170
      %p172 = scmp.ne.s32.totalorder %s161, %s164
      %p173 = scmp.eq.s32.totalorder %s25, 1
      %p174 = por %p172, %p173
      %p175 = scmp.ne.s32.totalorder %s164, %s165
      %p176 = scmp.eq.s32.totalorder %s25, 0
      %p177 = por %p175, %p176
      %p178 = scmp.ne.s32.totalorder %s164, %s165
      %p179 = scmp.eq.s32.totalorder %s26, 1
      %p180 = por %p178, %p179
      %p182 = scmp.ne.s32.totalorder %s165, %s181
      %p183 = scmp.eq.s32.totalorder %s26, 0
      %p184 = por %p182, %p183
      %p185 = scmp.le.s32.totalorder 1, %s20
      %p186 = scmp.lt.s32.totalorder %s20, 3
      %p187 = pnand %p185, %p186
      %p188 = pneg %p187
      // Predicated region
      $region9: #{tpu_custom_call.1} parent=5 // pred_check
        _
      $region10: #{tpu_custom_call.1} parent=5 // pred_check_branch
        %190 = sbr.rel (%p187) target = $region12
      $region11: #{tpu_custom_call.1} parent=5 // pred_region
        %s191 = ssub.s32 %s20, 1
        // Predicated region
        $region13: #{tpu_custom_call.1} parent=11 // pred_check
          %p192 = pneg %p67
        $region14: #{tpu_custom_call.1} parent=11 // pred_check_branch
          %194 = sbr.rel (%p192) target = $region16
        $region15: #{tpu_custom_call.1} parent=11 // pred_region
          %s196 = ssub.s32 256, 256
          %197 = vsyncadd [#allocation6], %s196
          %s198 = sshll.u32 [#allocation5], 4
          %s199 = int_to_ptr.vmem [resolvable:$true] %s198
          %204 = dma.hbm_to_vmem [thread:$0]  %s1, 256, %s199, [#allocation6], 64, 64, 4
        $region16: #{tpu_custom_call.1} parent=11 // pred_fallthru
          _
        // Predicated region
        $region17: #{tpu_custom_call.1} parent=11 // pred_check
          %p205 = pneg %p88
        $region18: #{tpu_custom_call.1} parent=11 // pred_check_branch
          %207 = sbr.rel (%p205) target = $region20
        $region19: #{tpu_custom_call.1} parent=11 // pred_region
          %s209 = ssub.s32 256, 256
          %210 = vsyncadd [#allocation6], %s209
          %s211 = sshll.u32 [#allocation7], 4
          %s212 = int_to_ptr.vmem [resolvable:$true] %s211
          %217 = dma.hbm_to_vmem [thread:$0]  %s2, 256, %s212, [#allocation6], 64, 64, 4
        $region20: #{tpu_custom_call.1} parent=11 // pred_fallthru
          _
        // Predicated region
        $region21: #{tpu_custom_call.1} parent=11 // pred_check
          %p218 = pneg %p109
        $region22: #{tpu_custom_call.1} parent=11 // pred_check_branch
          %220 = sbr.rel (%p218) target = $region24
        $region23: #{tpu_custom_call.1} parent=11 // pred_region
          %s222 = ssub.s32 256, 256
          %223 = vsyncadd [#allocation9], %s222
          %s224 = sshll.u32 [#allocation8], 4
          %s225 = int_to_ptr.vmem [resolvable:$true] %s224
          %230 = dma.hbm_to_vmem [thread:$0]  %s3, 256, %s225, [#allocation9], 64, 64, 4
        $region24: #{tpu_custom_call.1} parent=11 // pred_fallthru
          _
        // Predicated region
        $region25: #{tpu_custom_call.1} parent=11 // pred_check
          %p231 = pneg %p130
        $region26: #{tpu_custom_call.1} parent=11 // pred_check_branch
          %233 = sbr.rel (%p231) target = $region28
        $region27: #{tpu_custom_call.1} parent=11 // pred_region
          %s235 = ssub.s32 256, 256
          %236 = vsyncadd [#allocation9], %s235
          %s237 = sshll.u32 [#allocation10], 4
          %s238 = int_to_ptr.vmem [resolvable:$true] %s237
          %243 = dma.hbm_to_vmem [thread:$0]  %s4, 256, %s238, [#allocation9], 64, 64, 4
        $region28: #{tpu_custom_call.1} parent=11 // pred_fallthru
          _
        // Predicated region
        $region29: #{tpu_custom_call.1} parent=11 // pred_check
          %p244 = pneg %p151
        $region30: #{tpu_custom_call.1} parent=11 // pred_check_branch
          %246 = sbr.rel (%p244) target = $region32
        $region31: #{tpu_custom_call.1} parent=11 // pred_region
          _
        $region32: #{tpu_custom_call.1} parent=11 // pred_fallthru
          _
      $region12: #{tpu_custom_call.1} parent=5 // pred_fallthru
        _
      %p247 = scmp.lt.s32.totalorder %s20, 2
      // Predicated region
      $region33: #{tpu_custom_call.1} parent=5 // pred_check
        %p248 = pneg %p247
      $region34: #{tpu_custom_call.1} parent=5 // pred_check_branch
        %250 = sbr.rel (%p248) target = $region36
      $region35: #{tpu_custom_call.1} parent=5 // pred_region
        // Predicated region
        $region37: #{tpu_custom_call.1} parent=35 // pred_check
          %p251 = pneg %p40
        $region38: #{tpu_custom_call.1} parent=35 // pred_check_branch
          %253 = sbr.rel (%p251) target = $region40
        $region39: #{tpu_custom_call.1} parent=35 // pred_region
          %s254 = sand.u32 %s30, 1
          %s255 = scalar_lea.sflag [#allocation3], %s254
          %s256 = sand.u32 %s30, 1
          %s257 = smul.addr %s256, 8
          %s258 = scalar_lea.vmem [#allocation2], %s257
          %s260 = ssub.s32 128, 128
          %261 = vsyncadd %s255, %s260
          %s262 = smul.addr %s20, 128
          %s263 = scalar_lea.hbm %s0, %s262
          %s265 = sshll.u32 %s258, 4
          %s266 = int_to_ptr.vmem [resolvable:$true] %s265
          %268 = dma.hbm_to_vmem [thread:$0]  %s263, 128, %s266, %s255
        $region40: #{tpu_custom_call.1} parent=35 // pred_fallthru
          _
      $region36: #{tpu_custom_call.1} parent=5 // pred_fallthru
        _
      %p269 = scmp.le.s32.totalorder 1, %s20
      %p270 = scmp.lt.s32.totalorder %s20, 3
      %p271 = pnand %p269, %p270
      %p272 = pneg %p271
      // Predicated region
      $region41: #{tpu_custom_call.1} parent=5 // pred_check
        _
      $region42: #{tpu_custom_call.1} parent=5 // pred_check_branch
        %274 = sbr.rel (%p271) target = $region44
      $region43: #{tpu_custom_call.1} parent=5 // pred_region
        %s275 = ssub.s32 %s20, 1
        %s276 = sand.u32 %s33, 1
        %s277 = scalar_lea.sflag [#allocation3], %s276
        %s278 = sand.u32 %s33, 1
        %s279 = smul.addr %s278, 8
        %s280 = scalar_lea.vmem [#allocation2], %s279
        // Predicated region
        $region45: #{tpu_custom_call.1} parent=43 // pred_check
          %p281 = pneg %p46
        $region46: #{tpu_custom_call.1} parent=43 // pred_check_branch
          %283 = sbr.rel (%p281) target = $region48
        $region47: #{tpu_custom_call.1} parent=43 // pred_region
          %284 = dma.done %s277, 128
        $region48: #{tpu_custom_call.1} parent=43 // pred_fallthru
          _
        // Predicated region
        $region49: #{tpu_custom_call.1} parent=43 // pred_check
          %p285 = pneg %p67
        $region50: #{tpu_custom_call.1} parent=43 // pred_check_branch
          %287 = sbr.rel (%p285) target = $region52
        $region51: #{tpu_custom_call.1} parent=43 // pred_region
          %288 = dma.done [#allocation6], 256
        $region52: #{tpu_custom_call.1} parent=43 // pred_fallthru
          _
        // Predicated region
        $region53: #{tpu_custom_call.1} parent=43 // pred_check
          %p289 = pneg %p88
        $region54: #{tpu_custom_call.1} parent=43 // pred_check_branch
          %291 = sbr.rel (%p289) target = $region56
        $region55: #{tpu_custom_call.1} parent=43 // pred_region
          %292 = dma.done [#allocation6], 256
        $region56: #{tpu_custom_call.1} parent=43 // pred_fallthru
          _
        // Predicated region
        $region57: #{tpu_custom_call.1} parent=43 // pred_check
          %p293 = pneg %p109
        $region58: #{tpu_custom_call.1} parent=43 // pred_check_branch
          %295 = sbr.rel (%p293) target = $region60
        $region59: #{tpu_custom_call.1} parent=43 // pred_region
          %296 = dma.done [#allocation9], 256
        $region60: #{tpu_custom_call.1} parent=43 // pred_fallthru
          _
        // Predicated region
        $region61: #{tpu_custom_call.1} parent=43 // pred_check
          %p297 = pneg %p130
        $region62: #{tpu_custom_call.1} parent=43 // pred_check_branch
          %299 = sbr.rel (%p297) target = $region64
        $region63: #{tpu_custom_call.1} parent=43 // pred_region
          %300 = dma.done [#allocation9], 256
        $region64: #{tpu_custom_call.1} parent=43 // pred_fallthru
          _
        %s301 = sand.u32 %s33, 1
        %s302 = scalar_lea.sflag [#allocation3], %s301
        %s303 = sand.u32 %s33, 1
        %s304 = smul.addr %s303, 8
        %s305 = scalar_lea.vmem [#allocation2], %s304
        %p306 = pneg %p46
        %p307 = pneg %p43
        %p308 = pneg %p67
        %p309 = pneg %p64
        %p310 = pneg %p88
        %p311 = pneg %p85
        %p312 = pneg %p109
        %p313 = pneg %p106
        %p314 = pneg %p130
        %p315 = pneg %p127
        %p316 = pneg %p151
        %p317 = pneg %p148
        %p318 = pneg %p177
        %p319 = pneg %p174
        %s320 = sand.u32 %s164, 1
        %s321 = scalar_lea.sflag [#allocation4], %s320
        %s322 = sand.u32 %s164, 1
        %s323 = smul.addr %s322, 8
        %s324 = scalar_lea.vmem [#allocation11], %s323
        %v326 = vld [vmem:[%s280] sm:$0xff]
        %v327 = vpack.c.bf16 %v326, %v326
        %v328 = vld [vmem:[#allocation5] sm:$0xf]
        %v329 = vld [vmem:[#allocation5 + $0x4] sm:$0xf]
        %v330 = vld [vmem:[#allocation5 + $0x8] sm:$0xf]
        %v331 = vld [vmem:[#allocation5 + $0xc] sm:$0xf]
        %v336 = vunpack.c.l.b16 %v328
        %v337 = vunpack.c.l.b16 %v329
        %v338 = vunpack.c.l.b16 %v330
        %v339 = vunpack.c.l.b16 %v331
        %v340 = vpack.c.b16 %v337, %v336
        %v341 = vpack.c.b16 %v339, %v338
        %vm344 = vcmask 261120
        %v346 = vsel %vm344, %v327, 0
        %348 = vmatprep.subr.bf16.mxu0 0
        %349 = vmatpush1.bf16.msra.mxu0 0
        %350 = vmatprep.subr.bf16.mxu0 0
        %351 = vmatpush1.bf16.msra.mxu0 0
        %352 = vmatprep.subr.bf16.mxu0 0
        %353 = vmatpush1.bf16.msra.mxu0 0
        %354 = vmatprep.subr.bf16.mxu0 0
        %355 = vmatpush1.bf16.msra.mxu0 0
        %356 = vmatprep.subr.bf16.mxu0 0
        %357 = vmatpush1.bf16.msra.mxu0 0
        %358 = vmatprep.subr.bf16.mxu0 0
        %359 = vmatpush1.bf16.msra.mxu0 0
        %360 = vmatprep.subr.bf16.mxu0 0
        %361 = vmatpush1.bf16.msra.mxu0 %v341
        %362 = vmatprep.subr.bf16.mxu0 0
        %363 = vmatpush1.bf16.msra.mxu0 %v340
        %364 = vmatprep.subr.bf16.mxu0 0
        %365 = vmatpush2.bf16.msra.mxu0 0
        %366 = vmatprep.subr.bf16.mxu0 0
        %367 = vmatpush2.bf16.msra.mxu0 0
        %368 = vmatprep.subr.bf16.mxu0 0
        %369 = vmatpush2.bf16.msra.mxu0 0
        %370 = vmatprep.subr.bf16.mxu0 0
        %371 = vmatpush2.bf16.msra.mxu0 0
        %372 = vmatprep.subr.bf16.mxu0 0
        %373 = vmatpush2.bf16.msra.mxu0 0
        %374 = vmatprep.subr.bf16.mxu0 0
        %375 = vmatpush2.bf16.msra.mxu0 0
        %376 = vmatprep.subr.bf16.mxu0 0
        %377 = vmatpush2.bf16.msra.mxu0 0
        %378 = vmatprep.subr.bf16.mxu0 0
        %379 = vmatpush2.bf16.msra.mxu0 0
        %380 = vmatprep.mubr.bf16.mxu0 0
        %381 = vmatmul.mubr.bf16.gmra.mxu0 %v346
        %v382 = vpop.f32.mrf.mxu0
        %v383 = vadd.f32 0.0, %v382
        %v384 = vpop.f32.mrf.mxu0
        %v385 = vpop.f32.mrf.mxu0
        %v386 = vpop.f32.mrf.mxu0
        %387 = vdwg.mxu0
        %v388 = vld [vmem:[#allocation7] sm:$0xf]
        %v389 = vld [vmem:[#allocation7 + $0x4] sm:$0xf]
        %v390 = vld [vmem:[#allocation7 + $0x8] sm:$0xf]
        %v391 = vld [vmem:[#allocation7 + $0xc] sm:$0xf]
        %v396 = vunpack.c.l.b16 %v388
        %v397 = vunpack.c.l.b16 %v389
        %v398 = vunpack.c.l.b16 %v390
        %v399 = vunpack.c.l.b16 %v391
        %v400 = vpack.c.b16 %v397, %v396
        %v401 = vpack.c.b16 %v399, %v398
        %404 = vmatprep.subr.bf16.mxu0 0
        %405 = vmatpush1.bf16.msra.mxu0 0
        %406 = vmatprep.subr.bf16.mxu0 0
        %407 = vmatpush1.bf16.msra.mxu0 0
        %408 = vmatprep.subr.bf16.mxu0 0
        %409 = vmatpush1.bf16.msra.mxu0 0
        %410 = vmatprep.subr.bf16.mxu0 0
        %411 = vmatpush1.bf16.msra.mxu0 0
        %412 = vmatprep.subr.bf16.mxu0 0
        %413 = vmatpush1.bf16.msra.mxu0 0
        %414 = vmatprep.subr.bf16.mxu0 0
        %415 = vmatpush1.bf16.msra.mxu0 0
        %416 = vmatprep.subr.bf16.mxu0 0
        %417 = vmatpush1.bf16.msra.mxu0 %v401
        %418 = vmatprep.subr.bf16.mxu0 0
        %419 = vmatpush1.bf16.msra.mxu0 %v400
        %420 = vmatprep.subr.bf16.mxu0 0
        %421 = vmatpush2.bf16.msra.mxu0 0
        %422 = vmatprep.subr.bf16.mxu0 0
        %423 = vmatpush2.bf16.msra.mxu0 0
        %424 = vmatprep.subr.bf16.mxu0 0
        %425 = vmatpush2.bf16.msra.mxu0 0
        %426 = vmatprep.subr.bf16.mxu0 0
        %427 = vmatpush2.bf16.msra.mxu0 0
        %428 = vmatprep.subr.bf16.mxu0 0
        %429 = vmatpush2.bf16.msra.mxu0 0
        %430 = vmatprep.subr.bf16.mxu0 0
        %431 = vmatpush2.bf16.msra.mxu0 0
        %432 = vmatprep.subr.bf16.mxu0 0
        %433 = vmatpush2.bf16.msra.mxu0 0
        %434 = vmatprep.subr.bf16.mxu0 0
        %435 = vmatpush2.bf16.msra.mxu0 0
        %436 = vmatprep.mubr.bf16.mxu0 0
        %437 = vmatmul.mubr.bf16.gmra.mxu0 %v346
        %v438 = vpop.f32.mrf.mxu0
        %v439 = vadd.f32 0.0, %v438
        %v440 = vpop.f32.mrf.mxu0
        %v441 = vpop.f32.mrf.mxu0
        %v442 = vpop.f32.mrf.mxu0
        %443 = vdwg.mxu0
        %v444 = vld [vmem:[#allocation8] sm:$0xf]
        %v445 = vld [vmem:[#allocation8 + $0x4] sm:$0xf]
        %v446 = vld [vmem:[#allocation8 + $0x8] sm:$0xf]
        %v447 = vld [vmem:[#allocation8 + $0xc] sm:$0xf]
        %v452 = vunpack.c.l.b16 %v444
        %v453 = vunpack.c.l.b16 %v445
        %v454 = vunpack.c.l.b16 %v446
        %v455 = vunpack.c.l.b16 %v447
        %v456 = vpack.c.b16 %v453, %v452
        %v457 = vpack.c.b16 %v455, %v454
        %460 = vmatprep.subr.bf16.mxu0 0
        %461 = vmatpush1.bf16.msra.mxu0 0
        %462 = vmatprep.subr.bf16.mxu0 0
        %463 = vmatpush1.bf16.msra.mxu0 0
        %464 = vmatprep.subr.bf16.mxu0 0
        %465 = vmatpush1.bf16.msra.mxu0 0
        %466 = vmatprep.subr.bf16.mxu0 0
        %467 = vmatpush1.bf16.msra.mxu0 0
        %468 = vmatprep.subr.bf16.mxu0 0
        %469 = vmatpush1.bf16.msra.mxu0 0
        %470 = vmatprep.subr.bf16.mxu0 0
        %471 = vmatpush1.bf16.msra.mxu0 0
        %472 = vmatprep.subr.bf16.mxu0 0
        %473 = vmatpush1.bf16.msra.mxu0 %v457
        %474 = vmatprep.subr.bf16.mxu0 0
        %475 = vmatpush1.bf16.msra.mxu0 %v456
        %476 = vmatprep.subr.bf16.mxu0 0
        %477 = vmatpush2.bf16.msra.mxu0 0
        %478 = vmatprep.subr.bf16.mxu0 0
        %479 = vmatpush2.bf16.msra.mxu0 0
        %480 = vmatprep.subr.bf16.mxu0 0
        %481 = vmatpush2.bf16.msra.mxu0 0
        %482 = vmatprep.subr.bf16.mxu0 0
        %483 = vmatpush2.bf16.msra.mxu0 0
        %484 = vmatprep.subr.bf16.mxu0 0
        %485 = vmatpush2.bf16.msra.mxu0 0
        %486 = vmatprep.subr.bf16.mxu0 0
        %487 = vmatpush2.bf16.msra.mxu0 0
        %488 = vmatprep.subr.bf16.mxu0 0
        %489 = vmatpush2.bf16.msra.mxu0 0
        %490 = vmatprep.subr.bf16.mxu0 0
        %491 = vmatpush2.bf16.msra.mxu0 0
        %492 = vmatprep.mubr.bf16.mxu0 0
        %493 = vmatmul.mubr.bf16.gmra.mxu0 %v346
        %v494 = vpop.f32.mrf.mxu0
        %v495 = vadd.f32 0.0, %v494
        %v496 = vpop.f32.mrf.mxu0
        %v497 = vpop.f32.mrf.mxu0
        %v498 = vpop.f32.mrf.mxu0
        %499 = vdwg.mxu0
        %v500 = vmul.f32 %v383, 0.35355338
        %v501 = vld [vmem:[#allocation10] sm:$0xf]
        %v502 = vld [vmem:[#allocation10 + $0x4] sm:$0xf]
        %v503 = vld [vmem:[#allocation10 + $0x8] sm:$0xf]
        %v504 = vld [vmem:[#allocation10 + $0xc] sm:$0xf]
        %v505 = vpack.c.bf16 %v500, %v500
        %v506 = vpack.c.bf16 %v439, %v439
        %v507 = vpack.c.bf16 %v495, %v495
        %vm508 = vcmask 64512
        %v510 = vsel %vm508, %v505, 0
        %v513 = vsel %vm508, %v506, 0
        %515 = vmatprep.subr.bf16.mxu0 0
        %516 = vmatpush1.bf16.xpose.msra.mxu0 0
        %517 = vmatprep.subr.bf16.mxu0 0
        %518 = vmatpush1.bf16.xpose.msra.mxu0 0
        %519 = vmatprep.subr.bf16.mxu0 0
        %520 = vmatpush1.bf16.xpose.msra.mxu0 0
        %521 = vmatprep.subr.bf16.mxu0 0
        %522 = vmatpush1.bf16.xpose.msra.mxu0 0
        %523 = vmatprep.subr.bf16.mxu0 0
        %524 = vmatpush1.bf16.xpose.msra.mxu0 0
        %525 = vmatprep.subr.bf16.mxu0 0
        %526 = vmatpush1.bf16.xpose.msra.mxu0 0
        %527 = vmatprep.subr.bf16.mxu0 0
        %528 = vmatpush1.bf16.xpose.msra.mxu0 0
        %529 = vmatprep.subr.bf16.mxu0 0
        %530 = vmatpush1.bf16.xpose.msra.mxu0 %v513
        %531 = vmatprep.subr.bf16.mxu0 0
        %532 = vmatpush2.bf16.xpose.msra.mxu0 0
        %533 = vmatprep.subr.bf16.mxu0 0
        %534 = vmatpush2.bf16.xpose.msra.mxu0 0
        %535 = vmatprep.subr.bf16.mxu0 0
        %536 = vmatpush2.bf16.xpose.msra.mxu0 0
        %537 = vmatprep.subr.bf16.mxu0 0
        %538 = vmatpush2.bf16.xpose.msra.mxu0 0
        %539 = vmatprep.subr.bf16.mxu0 0
        %540 = vmatpush2.bf16.xpose.msra.mxu0 0
        %541 = vmatprep.subr.bf16.mxu0 0
        %542 = vmatpush2.bf16.xpose.msra.mxu0 0
        %543 = vmatprep.subr.bf16.mxu0 0
        %544 = vmatpush2.bf16.xpose.msra.mxu0 0
        %545 = vmatprep.subr.bf16.mxu0 0
        %546 = vmatpush2.bf16.xpose.msra.mxu0 0
        %547 = vmatprep.mubr.bf16.mxu0 0
        %548 = vmatmul.mubr.bf16.gmra.mxu0 %v510
        %v549 = vpop.f32.mrf.mxu0
        %v550 = vadd.f32 0.0, %v549
        %v551 = vpop.f32.mrf.mxu0
        %v552 = vpop.f32.mrf.mxu0
        %v553 = vpop.f32.mrf.mxu0
        %554 = vdwg.mxu0
        %v555 = vsel %vm508, %v550, -inf
        %556 = vmax.xlane.f32.xlu0 %v555
        %v557 = vpop.xlane.xlu0 %556
        %v558 = vsub.f32 %v550, %v557
        %v559 = vmul.f32 %v558, 1.442695
        %v560 = vpow.pop %v559
        %v561 = vsel %vm508, %v560, 0.0
        %562 = vadd.xlane.f32.xlu0 %v561
        %v563 = vpop.xlane.xlu0 %562
        %v564 = vrcp.pop %v563
        %v565 = vmul.f32 %v560, %v564
        %v566 = vpack.c.bf16 %v565, %v565
        %v568 = vsel %vm508, %v566, 0
        %vm570 = vcmask 1043456
        %v572 = vsel %vm570, %v507, 0
        %574 = vmatprep.subr.bf16.mxu0 0
        %575 = vmatpush1.bf16.msra.mxu0 0
        %576 = vmatprep.subr.bf16.mxu0 0
        %577 = vmatpush1.bf16.msra.mxu0 0
        %578 = vmatprep.subr.bf16.mxu0 0
        %579 = vmatpush1.bf16.msra.mxu0 0
        %580 = vmatprep.subr.bf16.mxu0 0
        %581 = vmatpush1.bf16.msra.mxu0 0
        %582 = vmatprep.subr.bf16.mxu0 0
        %583 = vmatpush1.bf16.msra.mxu0 0
        %584 = vmatprep.subr.bf16.mxu0 0
        %585 = vmatpush1.bf16.msra.mxu0 0
        %586 = vmatprep.subr.bf16.mxu0 0
        %587 = vmatpush1.bf16.msra.mxu0 0
        %588 = vmatprep.subr.bf16.mxu0 0
        %589 = vmatpush1.bf16.msra.mxu0 %v572
        %590 = vmatprep.subr.bf16.mxu0 0
        %591 = vmatpush2.bf16.msra.mxu0 0
        %592 = vmatprep.subr.bf16.mxu0 0
        %593 = vmatpush2.bf16.msra.mxu0 0
        %594 = vmatprep.subr.bf16.mxu0 0
        %595 = vmatpush2.bf16.msra.mxu0 0
        %596 = vmatprep.subr.bf16.mxu0 0
        %597 = vmatpush2.bf16.msra.mxu0 0
        %598 = vmatprep.subr.bf16.mxu0 0
        %599 = vmatpush2.bf16.msra.mxu0 0
        %600 = vmatprep.subr.bf16.mxu0 0
        %601 = vmatpush2.bf16.msra.mxu0 0
        %602 = vmatprep.subr.bf16.mxu0 0
        %603 = vmatpush2.bf16.msra.mxu0 0
        %604 = vmatprep.subr.bf16.mxu0 0
        %605 = vmatpush2.bf16.msra.mxu0 0
        %606 = vmatprep.mubr.bf16.mxu0 0
        %607 = vmatmul.mubr.bf16.gmra.mxu0 %v568
        %v608 = vpop.f32.mrf.mxu0
        %v609 = vadd.f32 0.0, %v608
        %v610 = vpop.f32.mrf.mxu0
        %v611 = vpop.f32.mrf.mxu0
        %v612 = vpop.f32.mrf.mxu0
        %613 = vdwg.mxu0
        %v614 = vpack.c.bf16 %v609, %v609
        %616 = vrot.lane.b32.xlu0 %v505, 120
        %v617 = vpop.permute.xlu0 %616
        %619 = vrot.lane.b32.xlu0 %v506, 120
        %v620 = vpop.permute.xlu0 %619
        %v622 = vsel %vm508, %v617, 0
        %v625 = vsel %vm508, %v620, 0
        %627 = vmatprep.subr.bf16.mxu0 0
        %628 = vmatpush1.bf16.xpose.msra.mxu0 0
        %629 = vmatprep.subr.bf16.mxu0 0
        %630 = vmatpush1.bf16.xpose.msra.mxu0 0
        %631 = vmatprep.subr.bf16.mxu0 0
        %632 = vmatpush1.bf16.xpose.msra.mxu0 0
        %633 = vmatprep.subr.bf16.mxu0 0
        %634 = vmatpush1.bf16.xpose.msra.mxu0 0
        %635 = vmatprep.subr.bf16.mxu0 0
        %636 = vmatpush1.bf16.xpose.msra.mxu0 0
        %637 = vmatprep.subr.bf16.mxu0 0
        %638 = vmatpush1.bf16.xpose.msra.mxu0 0
        %639 = vmatprep.subr.bf16.mxu0 0
        %640 = vmatpush1.bf16.xpose.msra.mxu0 0
        %641 = vmatprep.subr.bf16.mxu0 0
        %642 = vmatpush1.bf16.xpose.msra.mxu0 %v625
        %643 = vmatprep.subr.bf16.mxu0 0
        %644 = vmatpush2.bf16.xpose.msra.mxu0 0
        %645 = vmatprep.subr.bf16.mxu0 0
        %646 = vmatpush2.bf16.xpose.msra.mxu0 0
        %647 = vmatprep.subr.bf16.mxu0 0
        %648 = vmatpush2.bf16.xpose.msra.mxu0 0
        %649 = vmatprep.subr.bf16.mxu0 0
        %650 = vmatpush2.bf16.xpose.msra.mxu0 0
        %651 = vmatprep.subr.bf16.mxu0 0
        %652 = vmatpush2.bf16.xpose.msra.mxu0 0
        %653 = vmatprep.subr.bf16.mxu0 0
        %654 = vmatpush2.bf16.xpose.msra.mxu0 0
        %655 = vmatprep.subr.bf16.mxu0 0
        %656 = vmatpush2.bf16.xpose.msra.mxu0 0
        %657 = vmatprep.subr.bf16.mxu0 0
        %658 = vmatpush2.bf16.xpose.msra.mxu0 0
        %659 = vmatprep.mubr.bf16.mxu0 0
        %660 = vmatmul.mubr.bf16.gmra.mxu0 %v622
        %v661 = vpop.f32.mrf.mxu0
        %v662 = vadd.f32 0.0, %v661
        %v663 = vpop.f32.mrf.mxu0
        %v664 = vpop.f32.mrf.mxu0
        %v665 = vpop.f32.mrf.mxu0
        %666 = vdwg.mxu0
        %v667 = vsel %vm508, %v662, -inf
        %668 = vmax.xlane.f32.xlu0 %v667
        %v669 = vpop.xlane.xlu0 %668
        %v670 = vsub.f32 %v662, %v669
        %v671 = vmul.f32 %v670, 1.442695
        %v672 = vpow.pop %v671
        %v673 = vsel %vm508, %v672, 0.0
        %674 = vadd.xlane.f32.xlu0 %v673
        %v675 = vpop.xlane.xlu0 %674
        %v676 = vrcp.pop %v675
        %v677 = vmul.f32 %v672, %v676
        %v678 = vpack.c.bf16 %v677, %v677
        %680 = vrot.lane.b32.xlu0 %v507, 120
        %v681 = vpop.permute.xlu0 %680
        %v683 = vsel %vm508, %v678, 0
        %v686 = vsel %vm570, %v681, 0
        %688 = vmatprep.subr.bf16.mxu0 0
        %689 = vmatpush1.bf16.msra.mxu0 0
        %690 = vmatprep.subr.bf16.mxu0 0
        %691 = vmatpush1.bf16.msra.mxu0 0
        %692 = vmatprep.subr.bf16.mxu0 0
        %693 = vmatpush1.bf16.msra.mxu0 0
        %694 = vmatprep.subr.bf16.mxu0 0
        %695 = vmatpush1.bf16.msra.mxu0 0
        %696 = vmatprep.subr.bf16.mxu0 0
        %697 = vmatpush1.bf16.msra.mxu0 0
        %698 = vmatprep.subr.bf16.mxu0 0
        %699 = vmatpush1.bf16.msra.mxu0 0
        %700 = vmatprep.subr.bf16.mxu0 0
        %701 = vmatpush1.bf16.msra.mxu0 0
        %702 = vmatprep.subr.bf16.mxu0 0
        %703 = vmatpush1.bf16.msra.mxu0 %v686
        %704 = vmatprep.subr.bf16.mxu0 0
        %705 = vmatpush2.bf16.msra.mxu0 0
        %706 = vmatprep.subr.bf16.mxu0 0
        %707 = vmatpush2.bf16.msra.mxu0 0
        %708 = vmatprep.subr.bf16.mxu0 0
        %709 = vmatpush2.bf16.msra.mxu0 0
        %710 = vmatprep.subr.bf16.mxu0 0
        %711 = vmatpush2.bf16.msra.mxu0 0
        %712 = vmatprep.subr.bf16.mxu0 0
        %713 = vmatpush2.bf16.msra.mxu0 0
        %714 = vmatprep.subr.bf16.mxu0 0
        %715 = vmatpush2.bf16.msra.mxu0 0
        %716 = vmatprep.subr.bf16.mxu0 0
        %717 = vmatpush2.bf16.msra.mxu0 0
        %718 = vmatprep.subr.bf16.mxu0 0
        %719 = vmatpush2.bf16.msra.mxu0 0
        %720 = vmatprep.mubr.bf16.mxu0 0
        %721 = vmatmul.mubr.bf16.gmra.mxu0 %v683
        %v722 = vpop.f32.mrf.mxu0
        %v723 = vadd.f32 0.0, %v722
        %v724 = vpop.f32.mrf.mxu0
        %v725 = vpop.f32.mrf.mxu0
        %v726 = vpop.f32.mrf.mxu0
        %727 = vdwg.mxu0
        %v728 = vpack.c.bf16 %v723, %v723
        %v730 = vsel %vm508, %v728, 0
        %v733 = vsel %vm570, %v502, 0
        %735 = vmatprep.subr.bf16.mxu0 0
        %736 = vmatpush1.bf16.msra.mxu0 0
        %737 = vmatprep.subr.bf16.mxu0 0
        %738 = vmatpush1.bf16.msra.mxu0 0
        %739 = vmatprep.subr.bf16.mxu0 0
        %740 = vmatpush1.bf16.msra.mxu0 0
        %741 = vmatprep.subr.bf16.mxu0 0
        %742 = vmatpush1.bf16.msra.mxu0 0
        %743 = vmatprep.subr.bf16.mxu0 0
        %744 = vmatpush1.bf16.msra.mxu0 0
        %745 = vmatprep.subr.bf16.mxu0 0
        %746 = vmatpush1.bf16.msra.mxu0 0
        %747 = vmatprep.subr.bf16.mxu0 0
        %748 = vmatpush1.bf16.msra.mxu0 0
        %749 = vmatprep.subr.bf16.mxu0 0
        %750 = vmatpush1.bf16.msra.mxu0 %v733
        %751 = vmatprep.subr.bf16.mxu0 0
        %752 = vmatpush2.bf16.msra.mxu0 0
        %753 = vmatprep.subr.bf16.mxu0 0
        %754 = vmatpush2.bf16.msra.mxu0 0
        %755 = vmatprep.subr.bf16.mxu0 0
        %756 = vmatpush2.bf16.msra.mxu0 0
        %757 = vmatprep.subr.bf16.mxu0 0
        %758 = vmatpush2.bf16.msra.mxu0 0
        %759 = vmatprep.subr.bf16.mxu0 0
        %760 = vmatpush2.bf16.msra.mxu0 0
        %761 = vmatprep.subr.bf16.mxu0 0
        %762 = vmatpush2.bf16.msra.mxu0 0
        %763 = vmatprep.subr.bf16.mxu0 0
        %764 = vmatpush2.bf16.msra.mxu0 0
        %765 = vmatprep.subr.bf16.mxu0 0
        %766 = vmatpush2.bf16.msra.mxu0 0
        %767 = vmatprep.mubr.bf16.mxu0 0
        %768 = vmatmul.mubr.bf16.gmra.mxu0 %v730
        %v769 = vpop.f32.mrf.mxu0
        %v770 = vadd.f32 0.0, %v769
        %v771 = vpop.f32.mrf.mxu0
        %v772 = vpop.f32.mrf.mxu0
        %v773 = vpop.f32.mrf.mxu0
        %774 = vdwg.mxu0
        %v776 = vsel %vm508, %v614, 0
        %v779 = vsel %vm570, %v501, 0
        %781 = vmatprep.subr.bf16.mxu0 0
        %782 = vmatpush1.bf16.msra.mxu0 0
        %783 = vmatprep.subr.bf16.mxu0 0
        %784 = vmatpush1.bf16.msra.mxu0 0
        %785 = vmatprep.subr.bf16.mxu0 0
        %786 = vmatpush1.bf16.msra.mxu0 0
        %787 = vmatprep.subr.bf16.mxu0 0
        %788 = vmatpush1.bf16.msra.mxu0 0
        %789 = vmatprep.subr.bf16.mxu0 0
        %790 = vmatpush1.bf16.msra.mxu0 0
        %791 = vmatprep.subr.bf16.mxu0 0
        %792 = vmatpush1.bf16.msra.mxu0 0
        %793 = vmatprep.subr.bf16.mxu0 0
        %794 = vmatpush1.bf16.msra.mxu0 0
        %795 = vmatprep.subr.bf16.mxu0 0
        %796 = vmatpush1.bf16.msra.mxu0 %v779
        %797 = vmatprep.subr.bf16.mxu0 0
        %798 = vmatpush2.bf16.msra.mxu0 0
        %799 = vmatprep.subr.bf16.mxu0 0
        %800 = vmatpush2.bf16.msra.mxu0 0
        %801 = vmatprep.subr.bf16.mxu0 0
        %802 = vmatpush2.bf16.msra.mxu0 0
        %803 = vmatprep.subr.bf16.mxu0 0
        %804 = vmatpush2.bf16.msra.mxu0 0
        %805 = vmatprep.subr.bf16.mxu0 0
        %806 = vmatpush2.bf16.msra.mxu0 0
        %807 = vmatprep.subr.bf16.mxu0 0
        %808 = vmatpush2.bf16.msra.mxu0 0
        %809 = vmatprep.subr.bf16.mxu0 0
        %810 = vmatpush2.bf16.msra.mxu0 0
        %811 = vmatprep.subr.bf16.mxu0 0
        %812 = vmatpush2.bf16.msra.mxu0 0
        %813 = vmatprep.mubr.bf16.mxu0 0
        %814 = vmatmul.mubr.bf16.gmra.mxu0 %v776
        %v815 = vpop.f32.mrf.mxu0
        %v816 = vadd.f32 %v770, %v815
        %v817 = vpop.f32.mrf.mxu0
        %v818 = vpop.f32.mrf.mxu0
        %v819 = vpop.f32.mrf.mxu0
        %820 = vdwg.mxu0
        %821 = vrot.lane.b32.xlu0 %v505, 112
        %v822 = vpop.permute.xlu0 %821
        %823 = vrot.lane.b32.xlu0 %v506, 112
        %v824 = vpop.permute.xlu0 %823
        %v826 = vsel %vm508, %v822, 0
        %v829 = vsel %vm508, %v824, 0
        %831 = vmatprep.subr.bf16.mxu0 0
        %832 = vmatpush1.bf16.xpose.msra.mxu0 0
        %833 = vmatprep.subr.bf16.mxu0 0
        %834 = vmatpush1.bf16.xpose.msra.mxu0 0
        %835 = vmatprep.subr.bf16.mxu0 0
        %836 = vmatpush1.bf16.xpose.msra.mxu0 0
        %837 = vmatprep.subr.bf16.mxu0 0
        %838 = vmatpush1.bf16.xpose.msra.mxu0 0
        %839 = vmatprep.subr.bf16.mxu0 0
        %840 = vmatpush1.bf16.xpose.msra.mxu0 0
        %841 = vmatprep.subr.bf16.mxu0 0
        %842 = vmatpush1.bf16.xpose.msra.mxu0 0
        %843 = vmatprep.subr.bf16.mxu0 0
        %844 = vmatpush1.bf16.xpose.msra.mxu0 0
        %845 = vmatprep.subr.bf16.mxu0 0
        %846 = vmatpush1.bf16.xpose.msra.mxu0 %v829
        %847 = vmatprep.subr.bf16.mxu0 0
        %848 = vmatpush2.bf16.xpose.msra.mxu0 0
        %849 = vmatprep.subr.bf16.mxu0 0
        %850 = vmatpush2.bf16.xpose.msra.mxu0 0
        %851 = vmatprep.subr.bf16.mxu0 0
        %852 = vmatpush2.bf16.xpose.msra.mxu0 0
        %853 = vmatprep.subr.bf16.mxu0 0
        %854 = vmatpush2.bf16.xpose.msra.mxu0 0
        %855 = vmatprep.subr.bf16.mxu0 0
        %856 = vmatpush2.bf16.xpose.msra.mxu0 0
        %857 = vmatprep.subr.bf16.mxu0 0
        %858 = vmatpush2.bf16.xpose.msra.mxu0 0
        %859 = vmatprep.subr.bf16.mxu0 0
        %860 = vmatpush2.bf16.xpose.msra.mxu0 0
        %861 = vmatprep.subr.bf16.mxu0 0
        %862 = vmatpush2.bf16.xpose.msra.mxu0 0
        %863 = vmatprep.mubr.bf16.mxu0 0
        %864 = vmatmul.mubr.bf16.gmra.mxu0 %v826
        %v865 = vpop.f32.mrf.mxu0
        %v866 = vadd.f32 0.0, %v865
        %v867 = vpop.f32.mrf.mxu0
        %v868 = vpop.f32.mrf.mxu0
        %v869 = vpop.f32.mrf.mxu0
        %870 = vdwg.mxu0
        %v871 = vsel %vm508, %v866, -inf
        %872 = vmax.xlane.f32.xlu0 %v871
        %v873 = vpop.xlane.xlu0 %872
        %v874 = vsub.f32 %v866, %v873
        %v875 = vmul.f32 %v874, 1.442695
        %v876 = vpow.pop %v875
        %v877 = vsel %vm508, %v876, 0.0
        %878 = vadd.xlane.f32.xlu0 %v877
        %v879 = vpop.xlane.xlu0 %878
        %v880 = vrcp.pop %v879
        %v881 = vmul.f32 %v876, %v880
        %v882 = vpack.c.bf16 %v881, %v881
        %883 = vrot.lane.b32.xlu0 %v507, 112
        %v884 = vpop.permute.xlu0 %883
        %v886 = vsel %vm508, %v882, 0
        %v889 = vsel %vm570, %v884, 0
        %891 = vmatprep.subr.bf16.mxu0 0
        %892 = vmatpush1.bf16.msra.mxu0 0
        %893 = vmatprep.subr.bf16.mxu0 0
        %894 = vmatpush1.bf16.msra.mxu0 0
        %895 = vmatprep.subr.bf16.mxu0 0
        %896 = vmatpush1.bf16.msra.mxu0 0
        %897 = vmatprep.subr.bf16.mxu0 0
        %898 = vmatpush1.bf16.msra.mxu0 0
        %899 = vmatprep.subr.bf16.mxu0 0
        %900 = vmatpush1.bf16.msra.mxu0 0
        %901 = vmatprep.subr.bf16.mxu0 0
        %902 = vmatpush1.bf16.msra.mxu0 0
        %903 = vmatprep.subr.bf16.mxu0 0
        %904 = vmatpush1.bf16.msra.mxu0 0
        %905 = vmatprep.subr.bf16.mxu0 0
        %906 = vmatpush1.bf16.msra.mxu0 %v889
        %907 = vmatprep.subr.bf16.mxu0 0
        %908 = vmatpush2.bf16.msra.mxu0 0
        %909 = vmatprep.subr.bf16.mxu0 0
        %910 = vmatpush2.bf16.msra.mxu0 0
        %911 = vmatprep.subr.bf16.mxu0 0
        %912 = vmatpush2.bf16.msra.mxu0 0
        %913 = vmatprep.subr.bf16.mxu0 0
        %914 = vmatpush2.bf16.msra.mxu0 0
        %915 = vmatprep.subr.bf16.mxu0 0
        %916 = vmatpush2.bf16.msra.mxu0 0
        %917 = vmatprep.subr.bf16.mxu0 0
        %918 = vmatpush2.bf16.msra.mxu0 0
        %919 = vmatprep.subr.bf16.mxu0 0
        %920 = vmatpush2.bf16.msra.mxu0 0
        %921 = vmatprep.subr.bf16.mxu0 0
        %922 = vmatpush2.bf16.msra.mxu0 0
        %923 = vmatprep.mubr.bf16.mxu0 0
        %924 = vmatmul.mubr.bf16.gmra.mxu0 %v886
        %v925 = vpop.f32.mrf.mxu0
        %v926 = vadd.f32 0.0, %v925
        %v927 = vpop.f32.mrf.mxu0
        %v928 = vpop.f32.mrf.mxu0
        %v929 = vpop.f32.mrf.mxu0
        %930 = vdwg.mxu0
        %v931 = vpack.c.bf16 %v926, %v926
        %v933 = vsel %vm508, %v931, 0
        %v936 = vsel %vm570, %v503, 0
        %938 = vmatprep.subr.bf16.mxu0 0
        %939 = vmatpush1.bf16.msra.mxu0 0
        %940 = vmatprep.subr.bf16.mxu0 0
        %941 = vmatpush1.bf16.msra.mxu0 0
        %942 = vmatprep.subr.bf16.mxu0 0
        %943 = vmatpush1.bf16.msra.mxu0 0
        %944 = vmatprep.subr.bf16.mxu0 0
        %945 = vmatpush1.bf16.msra.mxu0 0
        %946 = vmatprep.subr.bf16.mxu0 0
        %947 = vmatpush1.bf16.msra.mxu0 0
        %948 = vmatprep.subr.bf16.mxu0 0
        %949 = vmatpush1.bf16.msra.mxu0 0
        %950 = vmatprep.subr.bf16.mxu0 0
        %951 = vmatpush1.bf16.msra.mxu0 0
        %952 = vmatprep.subr.bf16.mxu0 0
        %953 = vmatpush1.bf16.msra.mxu0 %v936
        %954 = vmatprep.subr.bf16.mxu0 0
        %955 = vmatpush2.bf16.msra.mxu0 0
        %956 = vmatprep.subr.bf16.mxu0 0
        %957 = vmatpush2.bf16.msra.mxu0 0
        %958 = vmatprep.subr.bf16.mxu0 0
        %959 = vmatpush2.bf16.msra.mxu0 0
        %960 = vmatprep.subr.bf16.mxu0 0
        %961 = vmatpush2.bf16.msra.mxu0 0
        %962 = vmatprep.subr.bf16.mxu0 0
        %963 = vmatpush2.bf16.msra.mxu0 0
        %964 = vmatprep.subr.bf16.mxu0 0
        %965 = vmatpush2.bf16.msra.mxu0 0
        %966 = vmatprep.subr.bf16.mxu0 0
        %967 = vmatpush2.bf16.msra.mxu0 0
        %968 = vmatprep.subr.bf16.mxu0 0
        %969 = vmatpush2.bf16.msra.mxu0 0
        %970 = vmatprep.mubr.bf16.mxu0 0
        %971 = vmatmul.mubr.bf16.gmra.mxu0 %v933
        %v972 = vpop.f32.mrf.mxu0
        %v973 = vadd.f32 0.0, %v972
        %v974 = vpop.f32.mrf.mxu0
        %v975 = vpop.f32.mrf.mxu0
        %v976 = vpop.f32.mrf.mxu0
        %977 = vdwg.mxu0
        %v978 = vadd.f32 %v816, %v973
        %979 = vrot.lane.b32.xlu0 %v505, 104
        %v980 = vpop.permute.xlu0 %979
        %981 = vrot.lane.b32.xlu0 %v506, 104
        %v982 = vpop.permute.xlu0 %981
        %v984 = vsel %vm508, %v980, 0
        %v987 = vsel %vm508, %v982, 0
        %989 = vmatprep.subr.bf16.mxu0 0
        %990 = vmatpush1.bf16.xpose.msra.mxu0 0
        %991 = vmatprep.subr.bf16.mxu0 0
        %992 = vmatpush1.bf16.xpose.msra.mxu0 0
        %993 = vmatprep.subr.bf16.mxu0 0
        %994 = vmatpush1.bf16.xpose.msra.mxu0 0
        %995 = vmatprep.subr.bf16.mxu0 0
        %996 = vmatpush1.bf16.xpose.msra.mxu0 0
        %997 = vmatprep.subr.bf16.mxu0 0
        %998 = vmatpush1.bf16.xpose.msra.mxu0 0
        %999 = vmatprep.subr.bf16.mxu0 0
        %1000 = vmatpush1.bf16.xpose.msra.mxu0 0
        %1001 = vmatprep.subr.bf16.mxu0 0
        %1002 = vmatpush1.bf16.xpose.msra.mxu0 0
        %1003 = vmatprep.subr.bf16.mxu0 0
        %1004 = vmatpush1.bf16.xpose.msra.mxu0 %v987
        %1005 = vmatprep.subr.bf16.mxu0 0
        %1006 = vmatpush2.bf16.xpose.msra.mxu0 0
        %1007 = vmatprep.subr.bf16.mxu0 0
        %1008 = vmatpush2.bf16.xpose.msra.mxu0 0
        %1009 = vmatprep.subr.bf16.mxu0 0
        %1010 = vmatpush2.bf16.xpose.msra.mxu0 0
        %1011 = vmatprep.subr.bf16.mxu0 0
        %1012 = vmatpush2.bf16.xpose.msra.mxu0 0
        %1013 = vmatprep.subr.bf16.mxu0 0
        %1014 = vmatpush2.bf16.xpose.msra.mxu0 0
        %1015 = vmatprep.subr.bf16.mxu0 0
        %1016 = vmatpush2.bf16.xpose.msra.mxu0 0
        %1017 = vmatprep.subr.bf16.mxu0 0
        %1018 = vmatpush2.bf16.xpose.msra.mxu0 0
        %1019 = vmatprep.subr.bf16.mxu0 0
        %1020 = vmatpush2.bf16.xpose.msra.mxu0 0
        %1021 = vmatprep.mubr.bf16.mxu0 0
        %1022 = vmatmul.mubr.bf16.gmra.mxu0 %v984
        %v1023 = vpop.f32.mrf.mxu0
        %v1024 = vadd.f32 0.0, %v1023
        %v1025 = vpop.f32.mrf.mxu0
        %v1026 = vpop.f32.mrf.mxu0
        %v1027 = vpop.f32.mrf.mxu0
        %1028 = vdwg.mxu0
        %v1029 = vsel %vm508, %v1024, -inf
        %1030 = vmax.xlane.f32.xlu0 %v1029
        %v1031 = vpop.xlane.xlu0 %1030
        %v1032 = vsub.f32 %v1024, %v1031
        %v1033 = vmul.f32 %v1032, 1.442695
        %v1034 = vpow.pop %v1033
        %v1035 = vsel %vm508, %v1034, 0.0
        %1036 = vadd.xlane.f32.xlu0 %v1035
        %v1037 = vpop.xlane.xlu0 %1036
        %v1038 = vrcp.pop %v1037
        %v1039 = vmul.f32 %v1034, %v1038
        %v1040 = vpack.c.bf16 %v1039, %v1039
        %1041 = vrot.lane.b32.xlu0 %v507, 104
        %v1042 = vpop.permute.xlu0 %1041
        %v1044 = vsel %vm508, %v1040, 0
        %v1047 = vsel %vm570, %v1042, 0
        %1049 = vmatprep.subr.bf16.mxu0 0
        %1050 = vmatpush1.bf16.msra.mxu0 0
        %1051 = vmatprep.subr.bf16.mxu0 0
        %1052 = vmatpush1.bf16.msra.mxu0 0
        %1053 = vmatprep.subr.bf16.mxu0 0
        %1054 = vmatpush1.bf16.msra.mxu0 0
        %1055 = vmatprep.subr.bf16.mxu0 0
        %1056 = vmatpush1.bf16.msra.mxu0 0
        %1057 = vmatprep.subr.bf16.mxu0 0
        %1058 = vmatpush1.bf16.msra.mxu0 0
        %1059 = vmatprep.subr.bf16.mxu0 0
        %1060 = vmatpush1.bf16.msra.mxu0 0
        %1061 = vmatprep.subr.bf16.mxu0 0
        %1062 = vmatpush1.bf16.msra.mxu0 0
        %1063 = vmatprep.subr.bf16.mxu0 0
        %1064 = vmatpush1.bf16.msra.mxu0 %v1047
        %1065 = vmatprep.subr.bf16.mxu0 0
        %1066 = vmatpush2.bf16.msra.mxu0 0
        %1067 = vmatprep.subr.bf16.mxu0 0
        %1068 = vmatpush2.bf16.msra.mxu0 0
        %1069 = vmatprep.subr.bf16.mxu0 0
        %1070 = vmatpush2.bf16.msra.mxu0 0
        %1071 = vmatprep.subr.bf16.mxu0 0
        %1072 = vmatpush2.bf16.msra.mxu0 0
        %1073 = vmatprep.subr.bf16.mxu0 0
        %1074 = vmatpush2.bf16.msra.mxu0 0
        %1075 = vmatprep.subr.bf16.mxu0 0
        %1076 = vmatpush2.bf16.msra.mxu0 0
        %1077 = vmatprep.subr.bf16.mxu0 0
        %1078 = vmatpush2.bf16.msra.mxu0 0
        %1079 = vmatprep.subr.bf16.mxu0 0
        %1080 = vmatpush2.bf16.msra.mxu0 0
        %1081 = vmatprep.mubr.bf16.mxu0 0
        %1082 = vmatmul.mubr.bf16.gmra.mxu0 %v1044
        %v1083 = vpop.f32.mrf.mxu0
        %v1084 = vadd.f32 0.0, %v1083
        %v1085 = vpop.f32.mrf.mxu0
        %v1086 = vpop.f32.mrf.mxu0
        %v1087 = vpop.f32.mrf.mxu0
        %1088 = vdwg.mxu0
        %v1089 = vpack.c.bf16 %v1084, %v1084
        %v1091 = vsel %vm508, %v1089, 0
        %v1094 = vsel %vm570, %v504, 0
        %1096 = vmatprep.subr.bf16.mxu0 0
        %1097 = vmatpush1.bf16.msra.mxu0 0
        %1098 = vmatprep.subr.bf16.mxu0 0
        %1099 = vmatpush1.bf16.msra.mxu0 0
        %1100 = vmatprep.subr.bf16.mxu0 0
        %1101 = vmatpush1.bf16.msra.mxu0 0
        %1102 = vmatprep.subr.bf16.mxu0 0
        %1103 = vmatpush1.bf16.msra.mxu0 0
        %1104 = vmatprep.subr.bf16.mxu0 0
        %1105 = vmatpush1.bf16.msra.mxu0 0
        %1106 = vmatprep.subr.bf16.mxu0 0
        %1107 = vmatpush1.bf16.msra.mxu0 0
        %1108 = vmatprep.subr.bf16.mxu0 0
        %1109 = vmatpush1.bf16.msra.mxu0 0
        %1110 = vmatprep.subr.bf16.mxu0 0
        %1111 = vmatpush1.bf16.msra.mxu0 %v1094
        %1112 = vmatprep.subr.bf16.mxu0 0
        %1113 = vmatpush2.bf16.msra.mxu0 0
        %1114 = vmatprep.subr.bf16.mxu0 0
        %1115 = vmatpush2.bf16.msra.mxu0 0
        %1116 = vmatprep.subr.bf16.mxu0 0
        %1117 = vmatpush2.bf16.msra.mxu0 0
        %1118 = vmatprep.subr.bf16.mxu0 0
        %1119 = vmatpush2.bf16.msra.mxu0 0
        %1120 = vmatprep.subr.bf16.mxu0 0
        %1121 = vmatpush2.bf16.msra.mxu0 0
        %1122 = vmatprep.subr.bf16.mxu0 0
        %1123 = vmatpush2.bf16.msra.mxu0 0
        %1124 = vmatprep.subr.bf16.mxu0 0
        %1125 = vmatpush2.bf16.msra.mxu0 0
        %1126 = vmatprep.subr.bf16.mxu0 0
        %1127 = vmatpush2.bf16.msra.mxu0 0
        %1128 = vmatprep.mubr.bf16.mxu0 0
        %1129 = vmatmul.mubr.bf16.gmra.mxu0 %v1091
        %v1130 = vpop.f32.mrf.mxu0
        %v1131 = vadd.f32 0.0, %v1130
        %v1132 = vpop.f32.mrf.mxu0
        %v1133 = vpop.f32.mrf.mxu0
        %v1134 = vpop.f32.mrf.mxu0
        %1135 = vdwg.mxu0
        %v1136 = vadd.f32 %v978, %v1131
        %v1137 = vld [vmem:[%s5] sm:$0x1]
        %v1139 = vlaneseq
        %v1140 = vshrl.u32 %v1139, 7
        %v1141 = vsub.s32 0, %v1140
        %v1142 = vrot.slane %v1137, %v1141
        %v1144 = vadd.f32 %v1136, %v1142
        %1145 = vst.msk [vmem:[%s324] sm:$0xff] %vm344, %v1144
        %s1146 = sand.u32 %s164, 1
        %s1147 = scalar_lea.sflag [#allocation4], %s1146
        %s1148 = sand.u32 %s164, 1
        %s1149 = smul.addr %s1148, 8
        %s1150 = scalar_lea.vmem [#allocation11], %s1149
        // Predicated region
        $region65: #{tpu_custom_call.1} parent=43 // pred_check
          %p1151 = pneg %p174
        $region66: #{tpu_custom_call.1} parent=43 // pred_check_branch
          %1153 = sbr.rel (%p1151) target = $region68
        $region67: #{tpu_custom_call.1} parent=43 // pred_region
          %s1155 = ssub.s32 128, 128
          %1156 = vsyncadd %s1147, %s1155
          %s1157 = smul.addr %s25, 128
          %s1158 = scalar_lea.hbm %s6, %s1157
          %s1160 = sshll.u32 %s1150, 4
          %s1161 = int_to_ptr.vmem [resolvable:$true] %s1160
          %1163 = dma.vmem_to_hbm [thread:$0]  %s1161, 128, %s1158, %s1147
        $region68: #{tpu_custom_call.1} parent=43 // pred_fallthru
          _
      $region44: #{tpu_custom_call.1} parent=5 // pred_fallthru
        _
      %p1164 = scmp.le.s32.totalorder 2, %s20
      // Predicated region
      $region69: #{tpu_custom_call.1} parent=5 // pred_check
        %p1165 = pneg %p1164
      $region70: #{tpu_custom_call.1} parent=5 // pred_check_branch
        %1167 = sbr.rel (%p1165) target = $region72
      $region71: #{tpu_custom_call.1} parent=5 // pred_region
        %s1168 = ssub.s32 %s20, 2
        // Predicated region
        $region73: #{tpu_custom_call.1} parent=71 // pred_check
          %p1169 = pneg %p180
        $region74: #{tpu_custom_call.1} parent=71 // pred_check_branch
          %1171 = sbr.rel (%p1169) target = $region76
        $region75: #{tpu_custom_call.1} parent=71 // pred_region
          %s1172 = sand.u32 %s165, 1
          %s1173 = scalar_lea.sflag [#allocation4], %s1172
          %s1174 = sand.u32 %s165, 1
          %s1175 = smul.addr %s1174, 8
          %s1176 = scalar_lea.vmem [#allocation11], %s1175
          %1177 = dma.done %s1173, 128
        $region76: #{tpu_custom_call.1} parent=71 // pred_fallthru
          _
      $region72: #{tpu_custom_call.1} parent=5 // pred_fallthru
        _
    $region6: #{tpu_custom_call.1} parent=1 // loop_footer
      %s24 = sadd.s32 1, %s20
    $region7: #{tpu_custom_call.1} parent=1 // loop_footer_branch
      %19 = sbr.rel target = $region3
    $region8: #{tpu_custom_call.1} parent=1 // loop_exit
      _
    %1178 = vsyncpa [#allocation3], 1
    %s1179 = scalar_lea.sflag [#allocation3], 1
    %1180 = vsyncpa %s1179, 1
    %1181 = vsyncpa [#allocation6], 1
    %1182 = vsyncpa [#allocation9], 1
    %1183 = vsyncpa [#allocation4], 1
    %s1184 = scalar_lea.sflag [#allocation4], 1
    %1185 = vsyncpa %s1184, 1

</llo_original>
